<compile_context>
chip_gen: v5e
topology: v5e:2x2
jax: 0.10.0
libtpu: 0.0.40
codegen_flags: <defaults>
</compile_context>

<pallas_src>
import jax
import jax.numpy as jnp
import numpy as np
from jax.experimental import pallas as pl
from jax.experimental.pallas import tpu as pltpu


# ----------------------------------------------------------------------------- kernel
def cnn2_kernel(x1c_ref, w1c_ref, b1_ref,
                p1e_ref, p1o_ref,
                sl2_ref, sr2_ref, w2s_ref, b2_ref,
                p2e_ref, p2o_ref,
                rsel_ref, w1p_ref, bfc1_ref,
                wfc2_ref, bfc2_ref,
                o_ref):
    dot = lambda a, b: jnp.dot(a, b, preferred_element_type=jnp.float32)

    # ---- conv1 (single matmul on im2col'd taps) + ReLU ------------------------
    h1 = jnp.maximum(dot(x1c_ref[...], w1c_ref[...]) + b1_ref[...], 0.0)   # (N*L, Chid)

    # ---- maxpool1: max over even/odd row selections ---------------------------
    h1p = jnp.maximum(dot(p1e_ref[...], h1), dot(p1o_ref[...], h1))        # (N*L/2, Chid)

    # ---- conv2: one wide matmul vs tap-stacked weights, then shift-add --------
    c2 = b2_ref.shape[-1]
    z2 = dot(h1p, w2s_ref[...])                                            # (N*L/2, 3*C2)
    y2 = (dot(sl2_ref[...], z2[:, 0:c2])              # tap 0 * x[l-1]
          + z2[:, c2:2 * c2]                          # tap 1 * x[l]
          + dot(sr2_ref[...], z2[:, 2 * c2:3 * c2])   # tap 2 * x[l+1]
          + b2_ref[...])
    h2 = jnp.maximum(y2, 0.0)                                              # (N*L/2, C2)

    # ---- maxpool2 --------------------------------------------------------------
    h2p = jnp.maximum(dot(p2e_ref[...], h2), dot(p2o_ref[...], h2))        # (N*L/4, C2)

    # ---- fc1: flatten over (channel, pooled position) as sum of per-position
    #      (row-select) @ (weight block) matmuls ---------------------------------
    l4 = rsel_ref.shape[0]
    acc = None
    for l in range(l4):                        # static unroll (L4 = 4)
        xl = dot(rsel_ref[l], h2p)             # (N, C2)  batch rows at pooled pos l
        part = dot(xl, w1p_ref[l])             # (N, 1024)
        acc = part if acc is None else acc + part
    h3 = jnp.maximum(acc + bfc1_ref[...], 0.0)                             # (N, 1024)

    # ---- fc2 (lane-dense (N, Cout*L) output) -----------------------------------
    o_ref[...] = (dot(h3, wfc2_ref[...]) + bfc2_ref[...]).astype(o_ref.dtype)


# ----------------------------------------------------------------------------- wrapper
def _pool_selectors(n_batch, length, parity):
    """(sel @ X)[b*length//2 + i] = X[b*length + 2*i + parity]."""
    sel = np.zeros((n_batch * length // 2, n_batch * length), np.float32)
    for b in range(n_batch):
        for i in range(length // 2):
            sel[b * (length // 2) + i, b * length + 2 * i + parity] = 1.0
    return sel


def _shift_matrix(n_batch, length, delta):
    """(S @ X)[row i] = X[row i+delta] within each batch element, 0 at the edges."""
    m = np.zeros((n_batch * length, n_batch * length), np.float32)
    for b in range(n_batch):
        for i in range(length):
            j = i + delta
            if 0 <= j < length:
                m[b * length + i, b * length + j] = 1.0
    return m


def cnn2_forward(x, params):
    (w1, b1), (w2, b2), (wf1, bf1), (wf2, bf2) = params
    N, Cin, L = x.shape
    Chid = w1.shape[0]
    C2 = w2.shape[0]                       # 128
    L2, L4 = L // 2, L // 4
    Dfc1 = wf1.shape[0]                    # 1024
    CoutL = wf2.shape[0]                   # output_channels * L
    f32 = jnp.float32

    # conv1 im2col (layout-only): (N*L, 3*Cin), column order (tap, in_channel)
    x_nlc = jnp.transpose(x, (0, 2, 1)).astype(f32)                  # (N, L, Cin)
    xp = jnp.pad(x_nlc, ((0, 0), (1, 1), (0, 0)))
    x1c = jnp.concatenate([xp[:, k:k + L, :] for k in range(3)], axis=-1)
    x1c = x1c.reshape(N * L, 3 * Cin)

    # packed weights (wrapper-side layout work only)
    w1c = jnp.transpose(w1, (2, 1, 0)).reshape(3 * Cin, Chid).astype(f32)          # (3Cin, Chid)
    w2s = jnp.concatenate([w2[:, :, k].T for k in range(3)], axis=-1).astype(f32)  # (Chid, 3*C2)
    w1p = jnp.transpose(wf1.reshape(Dfc1, C2, L4), (2, 1, 0)).astype(f32)          # (L4, C2, Dfc1)
    wf2t = wf2.T.astype(f32)                                                       # (Dfc1, CoutL)

    # tiny 0/1 selector / shift matrices (host-side, deterministic)
    p1e = jnp.asarray(_pool_selectors(N, L, 0))
    p1o = jnp.asarray(_pool_selectors(N, L, 1))
    p2e = jnp.asarray(_pool_selectors(N, L2, 0))
    p2o = jnp.asarray(_pool_selectors(N, L2, 1))
    sl2 = jnp.asarray(_shift_matrix(N, L2, -1))    # pairs with tap 0 (left neighbour)
    sr2 = jnp.asarray(_shift_matrix(N, L2, +1))    # pairs with tap 2 (right neighbour)
    rsel_np = np.zeros((L4, N, N * L4), np.float32)
    for l in range(L4):
        for n in range(N):
            rsel_np[l, n, n * L4 + l] = 1.0
    rsel = jnp.asarray(rsel_np)

    row = lambda v: v.reshape(1, -1).astype(f32)

    args = (x1c, w1c, row(b1),
            p1e, p1o,
            sl2, sr2, w2s, row(b2),
            p2e, p2o,
            rsel, w1p, row(bf1),
            wf2t, row(bf2))

    out_flat = pl.pallas_call(
        cnn2_kernel,
        out_shape=jax.ShapeDtypeStruct((N, CoutL), f32),
        in_specs=[pl.BlockSpec(memory_space=pltpu.MemorySpace.VMEM)] * len(args),
        out_specs=pl.BlockSpec(memory_space=pltpu.MemorySpace.VMEM),
    )(*args)
    return out_flat.reshape(N, CoutL // L, L)


# ----------------------------------------------------------------------------- reference
def cnn2_reference(x, params):
    """Pure-JAX reference mirroring the PyTorch CNN2.forward (NCL layout)."""
    (w1, b1), (w2, b2), (wf1, bf1), (wf2, bf2) = params

    def conv(x, w, b):
        y = jax.lax.conv_general_dilated(
            x, w, window_strides=(1,), padding=((1, 1),),
            dimension_numbers=("NCH", "OIH", "NCH"))
        return y + b[None, :, None]

    def maxpool(x):                                    # k=2, s=2 over length
        n, c, l = x.shape
        return jnp.max(x.reshape(n, c, l // 2, 2), axis=-1)

    h = maxpool(jnp.maximum(conv(x, w1, b1), 0.0))
    h = maxpool(jnp.maximum(conv(h, w2, b2), 0.0))
    n, _, L = x.shape
    flat = h.reshape(n, -1)
    h3 = jnp.maximum(flat @ wf1.T + bf1, 0.0)
    out = h3 @ wf2.T + bf2
    return out.reshape(n, wf2.shape[0] // L, L)


# ----------------------------------------------------------------------------- main
if __name__ == "__main__":
    # CNN2(input_channels=4, hidden_channels=32, output_channels=8, sequence_length=16)
    N, Cin, Chid, Cout, L = 2, 4, 32, 8, 16
    C2, L4, Dfc1 = 128, L // 4, 1024

    key = jax.random.PRNGKey(0)
    ks = jax.random.split(key, 9)

    x   = jax.random.normal(ks[0], (N, Cin, L), jnp.float32)
    w1  = jax.random.normal(ks[1], (Chid, Cin, 3), jnp.float32) * 0.3
    b1  = jax.random.normal(ks[2], (Chid,), jnp.float32) * 0.1
    w2  = jax.random.normal(ks[3], (C2, Chid, 3), jnp.float32) * 0.1
    b2  = jax.random.normal(ks[4], (C2,), jnp.float32) * 0.1
    wf1 = jax.random.normal(ks[5], (Dfc1, C2 * L4), jnp.float32) * 0.03
    bf1 = jax.random.normal(ks[6], (Dfc1,), jnp.float32) * 0.1
    wf2 = jax.random.normal(ks[7], (Cout * L, Dfc1), jnp.float32) * 0.02
    bf2 = jax.random.normal(ks[8], (Cout * L,), jnp.float32) * 0.1

    params = ((w1, b1), (w2, b2), (wf1, bf1), (wf2, bf2))

    out = jax.block_until_ready(cnn2_forward(x, params))
    assert out.shape == (N, Cout, L), out.shape

    ref = cnn2_reference(x, params)
    np.testing.assert_allclose(np.asarray(out), np.asarray(ref), rtol=2e-3, atol=2e-3)

    print("KERNEL_OK")
</pallas_src>

<mosaic_0001>
module attributes {stable_mosaic.version = 11 : i64} {
  func.func @cnn2_kernel(%arg0: memref<32x12xf32, #tpu.memory_space<vmem>>, %arg1: memref<12x32xf32, #tpu.memory_space<vmem>>, %arg2: memref<1x32xf32, #tpu.memory_space<vmem>>, %arg3: memref<16x32xf32, #tpu.memory_space<vmem>>, %arg4: memref<16x32xf32, #tpu.memory_space<vmem>>, %arg5: memref<16x16xf32, #tpu.memory_space<vmem>>, %arg6: memref<16x16xf32, #tpu.memory_space<vmem>>, %arg7: memref<32x384xf32, #tpu.memory_space<vmem>>, %arg8: memref<1x128xf32, #tpu.memory_space<vmem>>, %arg9: memref<8x16xf32, #tpu.memory_space<vmem>>, %arg10: memref<8x16xf32, #tpu.memory_space<vmem>>, %arg11: memref<4x2x8xf32, #tpu.memory_space<vmem>>, %arg12: memref<4x128x1024xf32, #tpu.memory_space<vmem>>, %arg13: memref<1x1024xf32, #tpu.memory_space<vmem>>, %arg14: memref<1024x128xf32, #tpu.memory_space<vmem>>, %arg15: memref<1x128xf32, #tpu.memory_space<vmem>>, %arg16: memref<2x128xf32, #tpu.memory_space<vmem>>) attributes {dimension_semantics = [], scalar_prefetch = 0 : i64, scratch_operands = 0 : i64, tpu.core_type = #tpu.core_type<tc>} {
    %c0 = arith.constant 0 : index
    %c0_0 = arith.constant 0 : index
    %0 = vector.load %arg0[%c0, %c0_0] : memref<32x12xf32, #tpu.memory_space<vmem>>, vector<32x12xf32>
    %c0_1 = arith.constant 0 : index
    %c0_2 = arith.constant 0 : index
    %1 = vector.load %arg1[%c0_1, %c0_2] : memref<12x32xf32, #tpu.memory_space<vmem>>, vector<12x32xf32>
    %cst = arith.constant dense<0.000000e+00> : vector<32x32xf32>
    %2 = tpu.matmul %0, %1, %cst {dimension_numbers = #tpu.dot_dimension_numbers<[1], [0], [0], [1], [0, 0, 1, 1], [], []>} : vector<32x12xf32>, vector<12x32xf32>, vector<32x32xf32> -> vector<32x32xf32>
    %c0_3 = arith.constant 0 : index
    %c0_4 = arith.constant 0 : index
    %3 = vector.load %arg2[%c0_3, %c0_4] : memref<1x32xf32, #tpu.memory_space<vmem>>, vector<1x32xf32>
    %4 = vector.broadcast %3 : vector<1x32xf32> to vector<32x32xf32>
    %5 = arith.addf %2, %4 : vector<32x32xf32>
    %cst_5 = arith.constant 0.000000e+00 : f32
    %6 = vector.broadcast %cst_5 : f32 to vector<32x32xf32>
    %7 = arith.maximumf %5, %6 : vector<32x32xf32>
    %c0_6 = arith.constant 0 : index
    %c0_7 = arith.constant 0 : index
    %8 = vector.load %arg3[%c0_6, %c0_7] : memref<16x32xf32, #tpu.memory_space<vmem>>, vector<16x32xf32>
    %cst_8 = arith.constant dense<0.000000e+00> : vector<16x32xf32>
    %9 = tpu.matmul %8, %7, %cst_8 {dimension_numbers = #tpu.dot_dimension_numbers<[1], [0], [0], [1], [0, 0, 1, 1], [], []>} : vector<16x32xf32>, vector<32x32xf32>, vector<16x32xf32> -> vector<16x32xf32>
    %c0_9 = arith.constant 0 : index
    %c0_10 = arith.constant 0 : index
    %10 = vector.load %arg4[%c0_9, %c0_10] : memref<16x32xf32, #tpu.memory_space<vmem>>, vector<16x32xf32>
    %cst_11 = arith.constant dense<0.000000e+00> : vector<16x32xf32>
    %11 = tpu.matmul %10, %7, %cst_11 {dimension_numbers = #tpu.dot_dimension_numbers<[1], [0], [0], [1], [0, 0, 1, 1], [], []>} : vector<16x32xf32>, vector<32x32xf32>, vector<16x32xf32> -> vector<16x32xf32>
    %12 = arith.maximumf %9, %11 : vector<16x32xf32>
    %c0_12 = arith.constant 0 : index
    %c0_13 = arith.constant 0 : index
    %13 = vector.load %arg7[%c0_12, %c0_13] : memref<32x384xf32, #tpu.memory_space<vmem>>, vector<32x384xf32>
    %cst_14 = arith.constant dense<0.000000e+00> : vector<16x384xf32>
    %14 = tpu.matmul %12, %13, %cst_14 {dimension_numbers = #tpu.dot_dimension_numbers<[1], [0], [0], [1], [0, 0, 1, 1], [], []>} : vector<16x32xf32>, vector<32x384xf32>, vector<16x384xf32> -> vector<16x384xf32>
    %c0_15 = arith.constant 0 : index
    %c0_16 = arith.constant 0 : index
    %15 = vector.load %arg5[%c0_15, %c0_16] : memref<16x16xf32, #tpu.memory_space<vmem>>, vector<16x16xf32>
    %16 = vector.extract_strided_slice %14 {offsets = [0, 0], sizes = [16, 128], strides = [1, 1]} : vector<16x384xf32> to vector<16x128xf32>
    %cst_17 = arith.constant dense<0.000000e+00> : vector<16x128xf32>
    %17 = tpu.matmul %15, %16, %cst_17 {dimension_numbers = #tpu.dot_dimension_numbers<[1], [0], [0], [1], [0, 0, 1, 1], [], []>} : vector<16x16xf32>, vector<16x128xf32>, vector<16x128xf32> -> vector<16x128xf32>
    %18 = vector.extract_strided_slice %14 {offsets = [0, 128], sizes = [16, 128], strides = [1, 1]} : vector<16x384xf32> to vector<16x128xf32>
    %19 = arith.addf %17, %18 : vector<16x128xf32>
    %c0_18 = arith.constant 0 : index
    %c0_19 = arith.constant 0 : index
    %20 = vector.load %arg6[%c0_18, %c0_19] : memref<16x16xf32, #tpu.memory_space<vmem>>, vector<16x16xf32>
    %21 = vector.extract_strided_slice %14 {offsets = [0, 256], sizes = [16, 128], strides = [1, 1]} : vector<16x384xf32> to vector<16x128xf32>
    %cst_20 = arith.constant dense<0.000000e+00> : vector<16x128xf32>
    %22 = tpu.matmul %20, %21, %cst_20 {dimension_numbers = #tpu.dot_dimension_numbers<[1], [0], [0], [1], [0, 0, 1, 1], [], []>} : vector<16x16xf32>, vector<16x128xf32>, vector<16x128xf32> -> vector<16x128xf32>
    %23 = arith.addf %19, %22 : vector<16x128xf32>
    %c0_21 = arith.constant 0 : index
    %c0_22 = arith.constant 0 : index
    %24 = vector.load %arg8[%c0_21, %c0_22] : memref<1x128xf32, #tpu.memory_space<vmem>>, vector<1x128xf32>
    %25 = vector.broadcast %24 : vector<1x128xf32> to vector<16x128xf32>
    %26 = arith.addf %23, %25 : vector<16x128xf32>
    %cst_23 = arith.constant 0.000000e+00 : f32
    %27 = vector.broadcast %cst_23 : f32 to vector<16x128xf32>
    %28 = arith.maximumf %26, %27 : vector<16x128xf32>
    %c0_24 = arith.constant 0 : index
    %c0_25 = arith.constant 0 : index
    %29 = vector.load %arg9[%c0_24, %c0_25] : memref<8x16xf32, #tpu.memory_space<vmem>>, vector<8x16xf32>
    %cst_26 = arith.constant dense<0.000000e+00> : vector<8x128xf32>
    %30 = tpu.matmul %29, %28, %cst_26 {dimension_numbers = #tpu.dot_dimension_numbers<[1], [0], [0], [1], [0, 0, 1, 1], [], []>} : vector<8x16xf32>, vector<16x128xf32>, vector<8x128xf32> -> vector<8x128xf32>
    %c0_27 = arith.constant 0 : index
    %c0_28 = arith.constant 0 : index
    %31 = vector.load %arg10[%c0_27, %c0_28] : memref<8x16xf32, #tpu.memory_space<vmem>>, vector<8x16xf32>
    %cst_29 = arith.constant dense<0.000000e+00> : vector<8x128xf32>
    %32 = tpu.matmul %31, %28, %cst_29 {dimension_numbers = #tpu.dot_dimension_numbers<[1], [0], [0], [1], [0, 0, 1, 1], [], []>} : vector<8x16xf32>, vector<16x128xf32>, vector<8x128xf32> -> vector<8x128xf32>
    %33 = arith.maximumf %30, %32 : vector<8x128xf32>
    %c0_30 = arith.constant 0 : index
    %c0_31 = arith.constant 0 : index
    %c0_32 = arith.constant 0 : index
    %34 = vector.load %arg11[%c0_30, %c0_31, %c0_32] : memref<4x2x8xf32, #tpu.memory_space<vmem>>, vector<1x2x8xf32>
    %35 = vector.shape_cast %34 : vector<1x2x8xf32> to vector<2x8xf32>
    %cst_33 = arith.constant dense<0.000000e+00> : vector<2x128xf32>
    %36 = tpu.matmul %35, %33, %cst_33 {dimension_numbers = #tpu.dot_dimension_numbers<[1], [0], [0], [1], [0, 0, 1, 1], [], []>} : vector<2x8xf32>, vector<8x128xf32>, vector<2x128xf32> -> vector<2x128xf32>
    %c0_34 = arith.constant 0 : index
    %c0_35 = arith.constant 0 : index
    %c0_36 = arith.constant 0 : index
    %37 = vector.load %arg12[%c0_34, %c0_35, %c0_36] : memref<4x128x1024xf32, #tpu.memory_space<vmem>>, vector<1x128x1024xf32>
    %38 = vector.shape_cast %37 : vector<1x128x1024xf32> to vector<128x1024xf32>
    %cst_37 = arith.constant dense<0.000000e+00> : vector<2x1024xf32>
    %39 = tpu.matmul %36, %38, %cst_37 {dimension_numbers = #tpu.dot_dimension_numbers<[1], [0], [0], [1], [0, 0, 1, 1], [], []>} : vector<2x128xf32>, vector<128x1024xf32>, vector<2x1024xf32> -> vector<2x1024xf32>
    %c1 = arith.constant 1 : index
    %c0_38 = arith.constant 0 : index
    %c0_39 = arith.constant 0 : index
    %40 = vector.load %arg11[%c1, %c0_38, %c0_39] : memref<4x2x8xf32, #tpu.memory_space<vmem>>, vector<1x2x8xf32>
    %41 = vector.shape_cast %40 : vector<1x2x8xf32> to vector<2x8xf32>
    %cst_40 = arith.constant dense<0.000000e+00> : vector<2x128xf32>
    %42 = tpu.matmul %41, %33, %cst_40 {dimension_numbers = #tpu.dot_dimension_numbers<[1], [0], [0], [1], [0, 0, 1, 1], [], []>} : vector<2x8xf32>, vector<8x128xf32>, vector<2x128xf32> -> vector<2x128xf32>
    %c1_41 = arith.constant 1 : index
    %c0_42 = arith.constant 0 : index
    %c0_43 = arith.constant 0 : index
    %43 = vector.load %arg12[%c1_41, %c0_42, %c0_43] : memref<4x128x1024xf32, #tpu.memory_space<vmem>>, vector<1x128x1024xf32>
    %44 = vector.shape_cast %43 : vector<1x128x1024xf32> to vector<128x1024xf32>
    %cst_44 = arith.constant dense<0.000000e+00> : vector<2x1024xf32>
    %45 = tpu.matmul %42, %44, %cst_44 {dimension_numbers = #tpu.dot_dimension_numbers<[1], [0], [0], [1], [0, 0, 1, 1], [], []>} : vector<2x128xf32>, vector<128x1024xf32>, vector<2x1024xf32> -> vector<2x1024xf32>
    %46 = arith.addf %39, %45 : vector<2x1024xf32>
    %c2 = arith.constant 2 : index
    %c0_45 = arith.constant 0 : index
    %c0_46 = arith.constant 0 : index
    %47 = vector.load %arg11[%c2, %c0_45, %c0_46] : memref<4x2x8xf32, #tpu.memory_space<vmem>>, vector<1x2x8xf32>
    %48 = vector.shape_cast %47 : vector<1x2x8xf32> to vector<2x8xf32>
    %cst_47 = arith.constant dense<0.000000e+00> : vector<2x128xf32>
    %49 = tpu.matmul %48, %33, %cst_47 {dimension_numbers = #tpu.dot_dimension_numbers<[1], [0], [0], [1], [0, 0, 1, 1], [], []>} : vector<2x8xf32>, vector<8x128xf32>, vector<2x128xf32> -> vector<2x128xf32>
    %c2_48 = arith.constant 2 : index
    %c0_49 = arith.constant 0 : index
    %c0_50 = arith.constant 0 : index
    %50 = vector.load %arg12[%c2_48, %c0_49, %c0_50] : memref<4x128x1024xf32, #tpu.memory_space<vmem>>, vector<1x128x1024xf32>
    %51 = vector.shape_cast %50 : vector<1x128x1024xf32> to vector<128x1024xf32>
    %cst_51 = arith.constant dense<0.000000e+00> : vector<2x1024xf32>
    %52 = tpu.matmul %49, %51, %cst_51 {dimension_numbers = #tpu.dot_dimension_numbers<[1], [0], [0], [1], [0, 0, 1, 1], [], []>} : vector<2x128xf32>, vector<128x1024xf32>, vector<2x1024xf32> -> vector<2x1024xf32>
    %53 = arith.addf %46, %52 : vector<2x1024xf32>
    %c3 = arith.constant 3 : index
    %c0_52 = arith.constant 0 : index
    %c0_53 = arith.constant 0 : index
    %54 = vector.load %arg11[%c3, %c0_52, %c0_53] : memref<4x2x8xf32, #tpu.memory_space<vmem>>, vector<1x2x8xf32>
    %55 = vector.shape_cast %54 : vector<1x2x8xf32> to vector<2x8xf32>
    %cst_54 = arith.constant dense<0.000000e+00> : vector<2x128xf32>
    %56 = tpu.matmul %55, %33, %cst_54 {dimension_numbers = #tpu.dot_dimension_numbers<[1], [0], [0], [1], [0, 0, 1, 1], [], []>} : vector<2x8xf32>, vector<8x128xf32>, vector<2x128xf32> -> vector<2x128xf32>
    %c3_55 = arith.constant 3 : index
    %c0_56 = arith.constant 0 : index
    %c0_57 = arith.constant 0 : index
    %57 = vector.load %arg12[%c3_55, %c0_56, %c0_57] : memref<4x128x1024xf32, #tpu.memory_space<vmem>>, vector<1x128x1024xf32>
    %58 = vector.shape_cast %57 : vector<1x128x1024xf32> to vector<128x1024xf32>
    %cst_58 = arith.constant dense<0.000000e+00> : vector<2x1024xf32>
    %59 = tpu.matmul %56, %58, %cst_58 {dimension_numbers = #tpu.dot_dimension_numbers<[1], [0], [0], [1], [0, 0, 1, 1], [], []>} : vector<2x128xf32>, vector<128x1024xf32>, vector<2x1024xf32> -> vector<2x1024xf32>
    %60 = arith.addf %53, %59 : vector<2x1024xf32>
    %c0_59 = arith.constant 0 : index
    %c0_60 = arith.constant 0 : index
    %61 = vector.load %arg13[%c0_59, %c0_60] : memref<1x1024xf32, #tpu.memory_space<vmem>>, vector<1x1024xf32>
    %62 = vector.broadcast %61 : vector<1x1024xf32> to vector<2x1024xf32>
    %63 = arith.addf %60, %62 : vector<2x1024xf32>
    %cst_61 = arith.constant 0.000000e+00 : f32
    %64 = vector.broadcast %cst_61 : f32 to vector<2x1024xf32>
    %65 = arith.maximumf %63, %64 : vector<2x1024xf32>
    %c0_62 = arith.constant 0 : index
    %c0_63 = arith.constant 0 : index
    %66 = vector.load %arg14[%c0_62, %c0_63] : memref<1024x128xf32, #tpu.memory_space<vmem>>, vector<1024x128xf32>
    %cst_64 = arith.constant dense<0.000000e+00> : vector<2x128xf32>
    %67 = tpu.matmul %65, %66, %cst_64 {dimension_numbers = #tpu.dot_dimension_numbers<[1], [0], [0], [1], [0, 0, 1, 1], [], []>} : vector<2x1024xf32>, vector<1024x128xf32>, vector<2x128xf32> -> vector<2x128xf32>
    %c0_65 = arith.constant 0 : index
    %c0_66 = arith.constant 0 : index
    %68 = vector.load %arg15[%c0_65, %c0_66] : memref<1x128xf32, #tpu.memory_space<vmem>>, vector<1x128xf32>
    %69 = vector.broadcast %68 : vector<1x128xf32> to vector<2x128xf32>
    %70 = arith.addf %67, %69 : vector<2x128xf32>
    %c0_67 = arith.constant 0 : index
    %c0_68 = arith.constant 0 : index
    %71 = vector.load %arg16[%c0_67, %c0_68] : memref<2x128xf32, #tpu.memory_space<vmem>>, vector<2x128xf32>
    tpu.vector_store %arg16[%c0_67, %c0_68], %70 {strides = array<i32>} : memref<2x128xf32, #tpu.memory_space<vmem>>, vector<2x128xf32>,
    return
  }
}

</mosaic_0001>

<llo_original>
// kernel: tpu_custom_call.1
$region0: #{tpu_custom_call.1}
  #allocation0 [shape = 'u32[]', space=smem, size = 0x4, offset = 0x4, fixed_abs, tag = 'smem constant byte address 0x4 - core index']
  #allocation1 [shape = 'u32[72,128]{1,0:T(1,128)}', space=vmem, size = 0x9000, scoped, tag = 'internal scratch']
  %s0 = inlined_call_operand.vmem [shape: f32[32,12], index: 0, kind: input, shape index: {}]
  %s1 = inlined_call_operand.hbm [shape: f32[12,32], index: 1, kind: input, shape index: {}]
  %s2 = inlined_call_operand.hbm [shape: f32[1,32], index: 2, kind: input, shape index: {}]
  %s3 = inlined_call_operand.hbm [shape: f32[16,32], index: 3, kind: input, shape index: {}]
  %s4 = inlined_call_operand.hbm [shape: f32[16,32], index: 4, kind: input, shape index: {}]
  %s5 = inlined_call_operand.hbm [shape: f32[16,16], index: 5, kind: input, shape index: {}]
  %s6 = inlined_call_operand.hbm [shape: f32[16,16], index: 6, kind: input, shape index: {}]
  %s7 = inlined_call_operand.hbm [shape: f32[32,384], index: 7, kind: input, shape index: {}]
  %s8 = inlined_call_operand.hbm [shape: f32[1,128], index: 8, kind: input, shape index: {}]
  %s9 = inlined_call_operand.hbm [shape: f32[8,16], index: 9, kind: input, shape index: {}]
  %s10 = inlined_call_operand.hbm [shape: f32[8,16], index: 10, kind: input, shape index: {}]
  %s11 = inlined_call_operand.hbm [shape: f32[4,2,8], index: 11, kind: input, shape index: {}]
  %s12 = inlined_call_operand.hbm [shape: f32[4,128,1024], index: 12, kind: input, shape index: {}]
  %s13 = inlined_call_operand.hbm [shape: f32[1,1024], index: 13, kind: input, shape index: {}]
  %s14 = inlined_call_operand.hbm [shape: f32[1024,128], index: 14, kind: input, shape index: {}]
  %s15 = inlined_call_operand.hbm [shape: f32[1,128], index: 15, kind: input, shape index: {}]
  %s16 = inlined_call_operand.hbm [shape: f32[2,128], index: 16, kind: output, shape index: {}]
  %s17 = sld [smem:[#allocation0]]
  $region134: #{tpu_custom_call.1} parent=0
    _
  %s19 = ssub.s32 1, %s17
  %s20 = scalar_select 0, %s19, %s17
  $region1: #{tpu_custom_call.1} parent=0
    #allocation2 [shape = 'u8[8192]{0}', space=vmem, size = 0x2000, scoped, tag = 'input window, operand 1, single buffered']
    #allocation3 [shape = 's32[1]{0}', space=sflag, size = 0x4, scoped, tag = 'scoped memory for tpu_custom_call.1']
    #allocation4 [shape = 's32[1]{0}', space=sflag, size = 0x4, scoped, tag = 'scoped memory for tpu_custom_call.1']
    #allocation5 [shape = 'u8[512]{0}', space=vmem, size = 0x400, scoped, tag = 'input window, operand 2, single buffered']
    #allocation6 [shape = 's32[1]{0}', space=sflag, size = 0x4, scoped, tag = 'scoped memory for tpu_custom_call.1']
    #allocation7 [shape = 'u8[8192]{0}', space=vmem, size = 0x2000, scoped, tag = 'input window, operand 3, single buffered']
    #allocation8 [shape = 'u8[8192]{0}', space=vmem, size = 0x2000, scoped, tag = 'input window, operand 4, single buffered']
    #allocation9 [shape = 's32[1]{0}', space=sflag, size = 0x4, scoped, tag = 'scoped memory for tpu_custom_call.1']
    #allocation10 [shape = 'u8[8192]{0}', space=vmem, size = 0x2000, scoped, tag = 'input window, operand 5, single buffered']
    #allocation11 [shape = 'u8[8192]{0}', space=vmem, size = 0x2000, scoped, tag = 'input window, operand 6, single buffered']
    #allocation12 [shape = 's32[1]{0}', space=sflag, size = 0x4, scoped, tag = 'scoped memory for tpu_custom_call.1']
    #allocation13 [shape = 'u8[49152]{0}', space=vmem, size = 0xc000, scoped, tag = 'input window, operand 7, single buffered']
    #allocation14 [shape = 'u8[512]{0}', space=vmem, size = 0x400, scoped, tag = 'input window, operand 8, single buffered']
    #allocation15 [shape = 's32[1]{0}', space=sflag, size = 0x4, scoped, tag = 'scoped memory for tpu_custom_call.1']
    #allocation16 [shape = 'u8[4096]{0}', space=vmem, size = 0x1000, scoped, tag = 'input window, operand 9, single buffered']
    #allocation17 [shape = 'u8[4096]{0}', space=vmem, size = 0x1000, scoped, tag = 'input window, operand 10, single buffered']
    #allocation18 [shape = 's32[1]{0}', space=sflag, size = 0x4, scoped, tag = 'scoped memory for tpu_custom_call.1']
    #allocation19 [shape = 'u8[4096]{0}', space=vmem, size = 0x1000, scoped, tag = 'input window, operand 11, single buffered']
    #allocation20 [shape = 'u8[2097152]{0}', space=vmem, size = 0x200000, scoped, tag = 'input window, operand 12, single buffered']
    #allocation21 [shape = 's32[1]{0}', space=sflag, size = 0x4, scoped, tag = 'scoped memory for tpu_custom_call.1']
    #allocation22 [shape = 'u8[4096]{0}', space=vmem, size = 0x1000, scoped, tag = 'input window, operand 13, single buffered']
    #allocation23 [shape = 'u8[524288]{0}', space=vmem, size = 0x80000, scoped, tag = 'input window, operand 14, single buffered']
    #allocation24 [shape = 's32[1]{0}', space=sflag, size = 0x4, scoped, tag = 'scoped memory for tpu_custom_call.1']
    #allocation25 [shape = 'u8[512]{0}', space=vmem, size = 0x400, scoped, tag = 'input window, operand 15, single buffered']
    #allocation26 [shape = 'u8[1024]{0}', space=vmem, size = 0x400, scoped, tag = 'output window, operand 0, single buffered']
    %21 = vsyncpa [#allocation3], 0
    %22 = vsyncpa [#allocation6], 0
    %23 = vsyncpa [#allocation9], 0
    %24 = vsyncpa [#allocation12], 0
    %25 = vsyncpa [#allocation15], 0
    %26 = vsyncpa [#allocation18], 0
    %27 = vsyncpa [#allocation21], 0
    %28 = vsyncpa [#allocation24], 0
    %29 = vsyncpa [#allocation4], 0
    // Predicated region
    $region2: #{tpu_custom_call.1} parent=1 // pred_check
      _
    $region3: #{tpu_custom_call.1} parent=1 // pred_check_branch
      %31 = sbr.rel (0) target = $region5
    $region4: #{tpu_custom_call.1} parent=1 // pred_region
      _
    $region5: #{tpu_custom_call.1} parent=1 // pred_fallthru
      _
    // Predicated region
    $region6: #{tpu_custom_call.1} parent=1 // pred_check
      _
    $region7: #{tpu_custom_call.1} parent=1 // pred_check_branch
      %33 = sbr.rel (0) target = $region9
    $region8: #{tpu_custom_call.1} parent=1 // pred_region
      %35 = vsyncadd [#allocation3], 0
      %s36 = sshll.u32 %s1, 4
      %s37 = int_to_ptr.hbm [resolvable:$true] %s36
      %s38 = sshll.u32 [#allocation2], 4
      %s39 = int_to_ptr.vmem [resolvable:$true] %s38
      %44 = dma.hbm_to_vmem [thread:$0]  %s37, 256, %s39, [#allocation3], 128, 128, 8
    $region9: #{tpu_custom_call.1} parent=1 // pred_fallthru
      _
    // Predicated region
    $region10: #{tpu_custom_call.1} parent=1 // pred_check
      _
    $region11: #{tpu_custom_call.1} parent=1 // pred_check_branch
      %46 = sbr.rel (0) target = $region13
    $region12: #{tpu_custom_call.1} parent=1 // pred_region
      %48 = vsyncadd [#allocation6], 0
      %s50 = sshll.u32 %s2, 4
      %s51 = int_to_ptr.hbm [resolvable:$true] %s50
      %s52 = sshll.u32 [#allocation5], 4
      %s53 = int_to_ptr.vmem [resolvable:$true] %s52
      %55 = dma.hbm_to_vmem [thread:$0]  %s51, 16, %s53, [#allocation6]
    $region13: #{tpu_custom_call.1} parent=1 // pred_fallthru
      _
    // Predicated region
    $region14: #{tpu_custom_call.1} parent=1 // pred_check
      _
    $region15: #{tpu_custom_call.1} parent=1 // pred_check_branch
      %57 = sbr.rel (0) target = $region17
    $region16: #{tpu_custom_call.1} parent=1 // pred_region
      %59 = vsyncadd [#allocation6], 0
      %s60 = sshll.u32 %s3, 4
      %s61 = int_to_ptr.hbm [resolvable:$true] %s60
      %s62 = sshll.u32 [#allocation7], 4
      %s63 = int_to_ptr.vmem [resolvable:$true] %s62
      %68 = dma.hbm_to_vmem [thread:$0]  %s61, 256, %s63, [#allocation6], 128, 128, 8
    $region17: #{tpu_custom_call.1} parent=1 // pred_fallthru
      _
    // Predicated region
    $region18: #{tpu_custom_call.1} parent=1 // pred_check
      _
    $region19: #{tpu_custom_call.1} parent=1 // pred_check_branch
      %70 = sbr.rel (0) target = $region21
    $region20: #{tpu_custom_call.1} parent=1 // pred_region
      %72 = vsyncadd [#allocation9], 0
      %s73 = sshll.u32 %s4, 4
      %s74 = int_to_ptr.hbm [resolvable:$true] %s73
      %s75 = sshll.u32 [#allocation8], 4
      %s76 = int_to_ptr.vmem [resolvable:$true] %s75
      %81 = dma.hbm_to_vmem [thread:$0]  %s74, 256, %s76, [#allocation9], 128, 128, 8
    $region21: #{tpu_custom_call.1} parent=1 // pred_fallthru
      _
    // Predicated region
    $region22: #{tpu_custom_call.1} parent=1 // pred_check
      _
    $region23: #{tpu_custom_call.1} parent=1 // pred_check_branch
      %83 = sbr.rel (0) target = $region25
    $region24: #{tpu_custom_call.1} parent=1 // pred_region
      %85 = vsyncadd [#allocation9], 0
      %s86 = sshll.u32 %s5, 4
      %s87 = int_to_ptr.hbm [resolvable:$true] %s86
      %s88 = sshll.u32 [#allocation10], 4
      %s89 = int_to_ptr.vmem [resolvable:$true] %s88
      %94 = dma.hbm_to_vmem [thread:$0]  %s87, 256, %s89, [#allocation9], 128, 128, 8
    $region25: #{tpu_custom_call.1} parent=1 // pred_fallthru
      _
    // Predicated region
    $region26: #{tpu_custom_call.1} parent=1 // pred_check
      _
    $region27: #{tpu_custom_call.1} parent=1 // pred_check_branch
      %96 = sbr.rel (0) target = $region29
    $region28: #{tpu_custom_call.1} parent=1 // pred_region
      %98 = vsyncadd [#allocation12], 0
      %s99 = sshll.u32 %s6, 4
      %s100 = int_to_ptr.hbm [resolvable:$true] %s99
      %s101 = sshll.u32 [#allocation11], 4
      %s102 = int_to_ptr.vmem [resolvable:$true] %s101
      %107 = dma.hbm_to_vmem [thread:$0]  %s100, 256, %s102, [#allocation12], 128, 128, 8
    $region29: #{tpu_custom_call.1} parent=1 // pred_fallthru
      _
    // Predicated region
    $region30: #{tpu_custom_call.1} parent=1 // pred_check
      _
    $region31: #{tpu_custom_call.1} parent=1 // pred_check_branch
      %109 = sbr.rel (0) target = $region33
    $region32: #{tpu_custom_call.1} parent=1 // pred_region
      %111 = vsyncadd [#allocation12], 0
      %s112 = sshll.u32 %s7, 4
      %s113 = int_to_ptr.hbm [resolvable:$true] %s112
      %s114 = sshll.u32 [#allocation13], 4
      %s115 = int_to_ptr.vmem [resolvable:$true] %s114
      %120 = dma.hbm_to_vmem [thread:$0]  %s113, 1536, %s115, [#allocation12], 384, 384, 24
    $region33: #{tpu_custom_call.1} parent=1 // pred_fallthru
      _
    // Predicated region
    $region34: #{tpu_custom_call.1} parent=1 // pred_check
      _
    $region35: #{tpu_custom_call.1} parent=1 // pred_check_branch
      %122 = sbr.rel (0) target = $region37
    $region36: #{tpu_custom_call.1} parent=1 // pred_region
      %124 = vsyncadd [#allocation15], 0
      %s126 = sshll.u32 %s8, 4
      %s127 = int_to_ptr.hbm [resolvable:$true] %s126
      %s128 = sshll.u32 [#allocation14], 4
      %s129 = int_to_ptr.vmem [resolvable:$true] %s128
      %131 = dma.hbm_to_vmem [thread:$0]  %s127, 16, %s129, [#allocation15]
    $region37: #{tpu_custom_call.1} parent=1 // pred_fallthru
      _
    // Predicated region
    $region38: #{tpu_custom_call.1} parent=1 // pred_check
      _
    $region39: #{tpu_custom_call.1} parent=1 // pred_check_branch
      %133 = sbr.rel (0) target = $region41
    $region40: #{tpu_custom_call.1} parent=1 // pred_region
      %135 = vsyncadd [#allocation15], 0
      %s137 = sshll.u32 %s9, 4
      %s138 = int_to_ptr.hbm [resolvable:$true] %s137
      %s139 = sshll.u32 [#allocation16], 4
      %s140 = int_to_ptr.vmem [resolvable:$true] %s139
      %142 = dma.hbm_to_vmem [thread:$0]  %s138, 128, %s140, [#allocation15]
    $region41: #{tpu_custom_call.1} parent=1 // pred_fallthru
      _
    // Predicated region
    $region42: #{tpu_custom_call.1} parent=1 // pred_check
      _
    $region43: #{tpu_custom_call.1} parent=1 // pred_check_branch
      %144 = sbr.rel (0) target = $region45
    $region44: #{tpu_custom_call.1} parent=1 // pred_region
      %146 = vsyncadd [#allocation18], 0
      %s148 = sshll.u32 %s10, 4
      %s149 = int_to_ptr.hbm [resolvable:$true] %s148
      %s150 = sshll.u32 [#allocation17], 4
      %s151 = int_to_ptr.vmem [resolvable:$true] %s150
      %153 = dma.hbm_to_vmem [thread:$0]  %s149, 128, %s151, [#allocation18]
    $region45: #{tpu_custom_call.1} parent=1 // pred_fallthru
      _
    // Predicated region
    $region46: #{tpu_custom_call.1} parent=1 // pred_check
      _
    $region47: #{tpu_custom_call.1} parent=1 // pred_check_branch
      %155 = sbr.rel (0) target = $region49
    $region48: #{tpu_custom_call.1} parent=1 // pred_region
      %157 = vsyncadd [#allocation18], 0
      %s158 = sshll.u32 %s11, 4
      %s159 = int_to_ptr.hbm [resolvable:$true] %s158
      %s160 = sshll.u32 [#allocation19], 4
      %s161 = int_to_ptr.vmem [resolvable:$true] %s160
      %166 = dma.hbm_to_vmem [thread:$0]  %s159, 128, %s161, [#allocation18], 32, 32, 2
    $region49: #{tpu_custom_call.1} parent=1 // pred_fallthru
      _
    // Predicated region
    $region50: #{tpu_custom_call.1} parent=1 // pred_check
      _
    $region51: #{tpu_custom_call.1} parent=1 // pred_check_branch
      %168 = sbr.rel (0) target = $region53
    $region52: #{tpu_custom_call.1} parent=1 // pred_region
      %170 = vsyncadd [#allocation21], 0
      %s171 = sshll.u32 %s12, 4
      %s172 = int_to_ptr.hbm [resolvable:$true] %s171
      %s173 = sshll.u32 [#allocation20], 4
      %s174 = int_to_ptr.vmem [resolvable:$true] %s173
      %179 = dma.hbm_to_vmem [thread:$0]  %s172, 65536, %s174, [#allocation21], 1024, 1024, 64
    $region53: #{tpu_custom_call.1} parent=1 // pred_fallthru
      _
    // Predicated region
    $region54: #{tpu_custom_call.1} parent=1 // pred_check
      _
    $region55: #{tpu_custom_call.1} parent=1 // pred_check_branch
      %181 = sbr.rel (0) target = $region57
    $region56: #{tpu_custom_call.1} parent=1 // pred_region
      %183 = vsyncadd [#allocation21], 0
      %s185 = sshll.u32 %s13, 4
      %s186 = int_to_ptr.hbm [resolvable:$true] %s185
      %s187 = sshll.u32 [#allocation22], 4
      %s188 = int_to_ptr.vmem [resolvable:$true] %s187
      %190 = dma.hbm_to_vmem [thread:$0]  %s186, 128, %s188, [#allocation21]
    $region57: #{tpu_custom_call.1} parent=1 // pred_fallthru
      _
    // Predicated region
    $region58: #{tpu_custom_call.1} parent=1 // pred_check
      _
    $region59: #{tpu_custom_call.1} parent=1 // pred_check_branch
      %192 = sbr.rel (0) target = $region61
    $region60: #{tpu_custom_call.1} parent=1 // pred_region
      %194 = vsyncadd [#allocation24], 0
      %s195 = sshll.u32 %s14, 4
      %s196 = int_to_ptr.hbm [resolvable:$true] %s195
      %s197 = sshll.u32 [#allocation23], 4
      %s198 = int_to_ptr.vmem [resolvable:$true] %s197
      %203 = dma.hbm_to_vmem [thread:$0]  %s196, 16384, %s198, [#allocation24], 128, 128, 8
    $region61: #{tpu_custom_call.1} parent=1 // pred_fallthru
      _
    // Predicated region
    $region62: #{tpu_custom_call.1} parent=1 // pred_check
      _
    $region63: #{tpu_custom_call.1} parent=1 // pred_check_branch
      %205 = sbr.rel (0) target = $region65
    $region64: #{tpu_custom_call.1} parent=1 // pred_region
      %207 = vsyncadd [#allocation24], 0
      %s209 = sshll.u32 %s15, 4
      %s210 = int_to_ptr.hbm [resolvable:$true] %s209
      %s211 = sshll.u32 [#allocation25], 4
      %s212 = int_to_ptr.vmem [resolvable:$true] %s211
      %214 = dma.hbm_to_vmem [thread:$0]  %s210, 16, %s212, [#allocation24]
    $region65: #{tpu_custom_call.1} parent=1 // pred_fallthru
      _
    // Predicated region
    $region66: #{tpu_custom_call.1} parent=1 // pred_check
      _
    $region67: #{tpu_custom_call.1} parent=1 // pred_check_branch
      %216 = sbr.rel (0) target = $region69
    $region68: #{tpu_custom_call.1} parent=1 // pred_region
      %218 = dma.done [#allocation3], 256
    $region69: #{tpu_custom_call.1} parent=1 // pred_fallthru
      _
    // Predicated region
    $region70: #{tpu_custom_call.1} parent=1 // pred_check
      _
    $region71: #{tpu_custom_call.1} parent=1 // pred_check_branch
      %220 = sbr.rel (0) target = $region73
    $region72: #{tpu_custom_call.1} parent=1 // pred_region
      %222 = dma.done [#allocation6], 16
    $region73: #{tpu_custom_call.1} parent=1 // pred_fallthru
      _
    // Predicated region
    $region74: #{tpu_custom_call.1} parent=1 // pred_check
      _
    $region75: #{tpu_custom_call.1} parent=1 // pred_check_branch
      %224 = sbr.rel (0) target = $region77
    $region76: #{tpu_custom_call.1} parent=1 // pred_region
      %226 = dma.done [#allocation6], 256
    $region77: #{tpu_custom_call.1} parent=1 // pred_fallthru
      _
    // Predicated region
    $region78: #{tpu_custom_call.1} parent=1 // pred_check
      _
    $region79: #{tpu_custom_call.1} parent=1 // pred_check_branch
      %228 = sbr.rel (0) target = $region81
    $region80: #{tpu_custom_call.1} parent=1 // pred_region
      %230 = dma.done [#allocation9], 256
    $region81: #{tpu_custom_call.1} parent=1 // pred_fallthru
      _
    // Predicated region
    $region82: #{tpu_custom_call.1} parent=1 // pred_check
      _
    $region83: #{tpu_custom_call.1} parent=1 // pred_check_branch
      %232 = sbr.rel (0) target = $region85
    $region84: #{tpu_custom_call.1} parent=1 // pred_region
      %234 = dma.done [#allocation9], 256
    $region85: #{tpu_custom_call.1} parent=1 // pred_fallthru
      _
    // Predicated region
    $region86: #{tpu_custom_call.1} parent=1 // pred_check
      _
    $region87: #{tpu_custom_call.1} parent=1 // pred_check_branch
      %236 = sbr.rel (0) target = $region89
    $region88: #{tpu_custom_call.1} parent=1 // pred_region
      %238 = dma.done [#allocation12], 256
    $region89: #{tpu_custom_call.1} parent=1 // pred_fallthru
      _
    // Predicated region
    $region90: #{tpu_custom_call.1} parent=1 // pred_check
      _
    $region91: #{tpu_custom_call.1} parent=1 // pred_check_branch
      %240 = sbr.rel (0) target = $region93
    $region92: #{tpu_custom_call.1} parent=1 // pred_region
      %242 = dma.done [#allocation12], 1536
    $region93: #{tpu_custom_call.1} parent=1 // pred_fallthru
      _
    // Predicated region
    $region94: #{tpu_custom_call.1} parent=1 // pred_check
      _
    $region95: #{tpu_custom_call.1} parent=1 // pred_check_branch
      %244 = sbr.rel (0) target = $region97
    $region96: #{tpu_custom_call.1} parent=1 // pred_region
      %246 = dma.done [#allocation15], 16
    $region97: #{tpu_custom_call.1} parent=1 // pred_fallthru
      _
    // Predicated region
    $region98: #{tpu_custom_call.1} parent=1 // pred_check
      _
    $region99: #{tpu_custom_call.1} parent=1 // pred_check_branch
      %248 = sbr.rel (0) target = $region101
    $region100: #{tpu_custom_call.1} parent=1 // pred_region
      %250 = dma.done [#allocation15], 128
    $region101: #{tpu_custom_call.1} parent=1 // pred_fallthru
      _
    // Predicated region
    $region102: #{tpu_custom_call.1} parent=1 // pred_check
      _
    $region103: #{tpu_custom_call.1} parent=1 // pred_check_branch
      %252 = sbr.rel (0) target = $region105
    $region104: #{tpu_custom_call.1} parent=1 // pred_region
      %254 = dma.done [#allocation18], 128
    $region105: #{tpu_custom_call.1} parent=1 // pred_fallthru
      _
    // Predicated region
    $region106: #{tpu_custom_call.1} parent=1 // pred_check
      _
    $region107: #{tpu_custom_call.1} parent=1 // pred_check_branch
      %256 = sbr.rel (0) target = $region109
    $region108: #{tpu_custom_call.1} parent=1 // pred_region
      %258 = dma.done [#allocation18], 128
    $region109: #{tpu_custom_call.1} parent=1 // pred_fallthru
      _
    // Predicated region
    $region110: #{tpu_custom_call.1} parent=1 // pred_check
      _
    $region111: #{tpu_custom_call.1} parent=1 // pred_check_branch
      %260 = sbr.rel (0) target = $region113
    $region112: #{tpu_custom_call.1} parent=1 // pred_region
      %262 = dma.done [#allocation21], 65536
    $region113: #{tpu_custom_call.1} parent=1 // pred_fallthru
      _
    // Predicated region
    $region114: #{tpu_custom_call.1} parent=1 // pred_check
      _
    $region115: #{tpu_custom_call.1} parent=1 // pred_check_branch
      %264 = sbr.rel (0) target = $region117
    $region116: #{tpu_custom_call.1} parent=1 // pred_region
      %266 = dma.done [#allocation21], 128
    $region117: #{tpu_custom_call.1} parent=1 // pred_fallthru
      _
    // Predicated region
    $region118: #{tpu_custom_call.1} parent=1 // pred_check
      _
    $region119: #{tpu_custom_call.1} parent=1 // pred_check_branch
      %268 = sbr.rel (0) target = $region121
    $region120: #{tpu_custom_call.1} parent=1 // pred_region
      %270 = dma.done [#allocation24], 16384
    $region121: #{tpu_custom_call.1} parent=1 // pred_fallthru
      _
    // Predicated region
    $region122: #{tpu_custom_call.1} parent=1 // pred_check
      _
    $region123: #{tpu_custom_call.1} parent=1 // pred_check_branch
      %272 = sbr.rel (0) target = $region125
    $region124: #{tpu_custom_call.1} parent=1 // pred_region
      %274 = dma.done [#allocation24], 16
    $region125: #{tpu_custom_call.1} parent=1 // pred_fallthru
      _
    %v275 = vld [vmem:[%s0] sm:$0xff]
    %v276 = vld [vmem:[%s0 + $0x8] sm:$0xff]
    %v277 = vld [vmem:[%s0 + $0x10] sm:$0xff]
    %v278 = vld [vmem:[%s0 + $0x18] sm:$0xff]
    %v279 = vld [vmem:[#allocation2] sm:$0xff]
    %v280 = vld [vmem:[#allocation2 + $0x8] sm:$0xf]
    %v281 = vld [vmem:[#allocation5] sm:$0x1]
    %v283 = vperm.slane %v281, 0
    %vm285 = vcmask 97280
    %v287 = vsel %vm285, %v275, 0
    %v290 = vsel %vm285, %v276, 0
    %v293 = vsel %vm285, %v277, 0
    %v296 = vsel %vm285, %v278, 0
    %vm298 = vcmask 1043456
    %v300 = vsel %vm298, %v280, 0
    %302 = vmatpush.msra.mxu0 0.0
    %303 = vmatpush.msra.mxu0 0.0
    %304 = vmatpush.msra.mxu0 0.0
    %305 = vmatpush.msra.mxu0 0.0
    %306 = vmatpush.msra.mxu0 0.0
    %307 = vmatpush.msra.mxu0 0.0
    %308 = vmatpush.msra.mxu0 0.0
    %309 = vmatpush.msra.mxu0 0.0
    %310 = vmatpush.msra.mxu0 0.0
    %311 = vmatpush.msra.mxu0 0.0
    %312 = vmatpush.msra.mxu0 0.0
    %313 = vmatpush.msra.mxu0 0.0
    %314 = vmatpush.msra.mxu0 0.0
    %315 = vmatpush.msra.mxu0 0.0
    %316 = vmatpush.msra.mxu0 %v300
    %317 = vmatpush.msra.mxu0 %v279
    %318 = vmatmul.f32.gmra.mxu0 %v287
    %v319 = vpop.f32.mrf.mxu0
    %v320 = vadd.f32 %v283, %v319
    %321 = vmatmul.f32.gmra.mxu0 %v290
    %v322 = vpop.f32.mrf.mxu0
    %v323 = vadd.f32 %v283, %v322
    %324 = vmatmul.f32.gmra.mxu0 %v293
    %v325 = vpop.f32.mrf.mxu0
    %v326 = vadd.f32 %v283, %v325
    %327 = vmatmul.f32.gmra.mxu0 %v296
    %v328 = vpop.f32.mrf.mxu0
    %v329 = vadd.f32 %v283, %v328
    %330 = vdwg.mxu0
    %v331 = vmax.f32 %v320, 0.0
    %v332 = vmax.f32 %v323, 0.0
    %v333 = vmax.f32 %v326, 0.0
    %v334 = vmax.f32 %v329, 0.0
    %v335 = vld [vmem:[#allocation7] sm:$0xff]
    %v336 = vld [vmem:[#allocation7 + $0x8] sm:$0xff]
    %vm337 = vcmask 261120
    %v339 = vsel %vm337, %v335, 0
    %v342 = vsel %vm337, %v336, 0
    %344 = vmatpush.msra.mxu0 0.0
    %345 = vmatpush.msra.mxu0 0.0
    %346 = vmatpush.msra.mxu0 0.0
    %347 = vmatpush.msra.mxu0 0.0
    %348 = vmatpush.msra.mxu0 0.0
    %349 = vmatpush.msra.mxu0 0.0
    %350 = vmatpush.msra.mxu0 0.0
    %351 = vmatpush.msra.mxu0 0.0
    %352 = vmatpush.msra.mxu0 0.0
    %353 = vmatpush.msra.mxu0 0.0
    %354 = vmatpush.msra.mxu0 0.0
    %355 = vmatpush.msra.mxu0 0.0
    %356 = vmatpush.msra.mxu0 %v334
    %357 = vmatpush.msra.mxu0 %v333
    %358 = vmatpush.msra.mxu0 %v332
    %359 = vmatpush.msra.mxu0 %v331
    %360 = vmatmul.f32.gmra.mxu0 %v339
    %v361 = vpop.f32.mrf.mxu0
    %v362 = vadd.f32 0.0, %v361
    %363 = vmatmul.f32.gmra.mxu0 %v342
    %v364 = vpop.f32.mrf.mxu0
    %v365 = vadd.f32 0.0, %v364
    %366 = vdwg.mxu0
    %v367 = vld [vmem:[#allocation8] sm:$0xff]
    %v368 = vld [vmem:[#allocation8 + $0x8] sm:$0xff]
    %v370 = vsel %vm337, %v367, 0
    %v373 = vsel %vm337, %v368, 0
    %375 = vmatpush.msra.mxu0 0.0
    %376 = vmatpush.msra.mxu0 0.0
    %377 = vmatpush.msra.mxu0 0.0
    %378 = vmatpush.msra.mxu0 0.0
    %379 = vmatpush.msra.mxu0 0.0
    %380 = vmatpush.msra.mxu0 0.0
    %381 = vmatpush.msra.mxu0 0.0
    %382 = vmatpush.msra.mxu0 0.0
    %383 = vmatpush.msra.mxu0 0.0
    %384 = vmatpush.msra.mxu0 0.0
    %385 = vmatpush.msra.mxu0 0.0
    %386 = vmatpush.msra.mxu0 0.0
    %387 = vmatpush.msra.mxu0 %v334
    %388 = vmatpush.msra.mxu0 %v333
    %389 = vmatpush.msra.mxu0 %v332
    %390 = vmatpush.msra.mxu0 %v331
    %391 = vmatmul.f32.gmra.mxu0 %v370
    %v392 = vpop.f32.mrf.mxu0
    %v393 = vadd.f32 0.0, %v392
    %394 = vmatmul.f32.gmra.mxu0 %v373
    %v395 = vpop.f32.mrf.mxu0
    %v396 = vadd.f32 0.0, %v395
    %397 = vdwg.mxu0
    %v398 = vmax.f32 %v362, %v393
    %v399 = vmax.f32 %v365, %v396
    %v400 = vld [vmem:[#allocation13] sm:$0xff]
    %v401 = vld [vmem:[#allocation13 + $0x8] sm:$0xff]
    %v402 = vld [vmem:[#allocation13 + $0x10] sm:$0xff]
    %v403 = vld [vmem:[#allocation13 + $0x18] sm:$0xff]
    %v404 = vld [vmem:[#allocation13 + $0x20] sm:$0xff]
    %v405 = vld [vmem:[#allocation13 + $0x28] sm:$0xff]
    %v406 = vld [vmem:[#allocation13 + $0x30] sm:$0xff]
    %v407 = vld [vmem:[#allocation13 + $0x38] sm:$0xff]
    %v408 = vld [vmem:[#allocation13 + $0x40] sm:$0xff]
    %v409 = vld [vmem:[#allocation13 + $0x48] sm:$0xff]
    %v410 = vld [vmem:[#allocation13 + $0x50] sm:$0xff]
    %v411 = vld [vmem:[#allocation13 + $0x58] sm:$0xff]
    %v413 = vsel %vm337, %v398, 0
    %v416 = vsel %vm337, %v399, 0
    %418 = vmatpush.msra.mxu0 0.0
    %419 = vmatpush.msra.mxu0 0.0
    %420 = vmatpush.msra.mxu0 0.0
    %421 = vmatpush.msra.mxu0 0.0
    %422 = vmatpush.msra.mxu0 0.0
    %423 = vmatpush.msra.mxu0 0.0
    %424 = vmatpush.msra.mxu0 0.0
    %425 = vmatpush.msra.mxu0 0.0
    %426 = vmatpush.msra.mxu0 0.0
    %427 = vmatpush.msra.mxu0 0.0
    %428 = vmatpush.msra.mxu0 0.0
    %429 = vmatpush.msra.mxu0 0.0
    %430 = vmatpush.msra.mxu0 %v409
    %431 = vmatpush.msra.mxu0 %v406
    %432 = vmatpush.msra.mxu0 %v403
    %433 = vmatpush.msra.mxu0 %v400
    %434 = vmatmul.f32.gmra.mxu0 %v413
    %v435 = vpop.f32.mrf.mxu0
    %v436 = vadd.f32 0.0, %v435
    %437 = vmatmul.f32.gmra.mxu0 %v416
    %v438 = vpop.f32.mrf.mxu0
    %v439 = vadd.f32 0.0, %v438
    %440 = vdwg.mxu0
    %441 = vmatpush.msra.mxu0 0.0
    %442 = vmatpush.msra.mxu0 0.0
    %443 = vmatpush.msra.mxu0 0.0
    %444 = vmatpush.msra.mxu0 0.0
    %445 = vmatpush.msra.mxu0 0.0
    %446 = vmatpush.msra.mxu0 0.0
    %447 = vmatpush.msra.mxu0 0.0
    %448 = vmatpush.msra.mxu0 0.0
    %449 = vmatpush.msra.mxu0 0.0
    %450 = vmatpush.msra.mxu0 0.0
    %451 = vmatpush.msra.mxu0 0.0
    %452 = vmatpush.msra.mxu0 0.0
    %453 = vmatpush.msra.mxu0 %v410
    %454 = vmatpush.msra.mxu0 %v407
    %455 = vmatpush.msra.mxu0 %v404
    %456 = vmatpush.msra.mxu0 %v401
    %457 = vmatmul.f32.gmra.mxu0 %v413
    %v458 = vpop.f32.mrf.mxu0
    %v459 = vadd.f32 0.0, %v458
    %460 = vmatmul.f32.gmra.mxu0 %v416
    %v461 = vpop.f32.mrf.mxu0
    %v462 = vadd.f32 0.0, %v461
    %463 = vdwg.mxu0
    %464 = vmatpush.msra.mxu0 0.0
    %465 = vmatpush.msra.mxu0 0.0
    %466 = vmatpush.msra.mxu0 0.0
    %467 = vmatpush.msra.mxu0 0.0
    %468 = vmatpush.msra.mxu0 0.0
    %469 = vmatpush.msra.mxu0 0.0
    %470 = vmatpush.msra.mxu0 0.0
    %471 = vmatpush.msra.mxu0 0.0
    %472 = vmatpush.msra.mxu0 0.0
    %473 = vmatpush.msra.mxu0 0.0
    %474 = vmatpush.msra.mxu0 0.0
    %475 = vmatpush.msra.mxu0 0.0
    %476 = vmatpush.msra.mxu0 %v411
    %477 = vmatpush.msra.mxu0 %v408
    %478 = vmatpush.msra.mxu0 %v405
    %479 = vmatpush.msra.mxu0 %v402
    %480 = vmatmul.f32.gmra.mxu0 %v413
    %v481 = vpop.f32.mrf.mxu0
    %v482 = vadd.f32 0.0, %v481
    %483 = vmatmul.f32.gmra.mxu0 %v416
    %v484 = vpop.f32.mrf.mxu0
    %v485 = vadd.f32 0.0, %v484
    %486 = vdwg.mxu0
    %v487 = vld [vmem:[#allocation10] sm:$0xff]
    %v488 = vld [vmem:[#allocation10 + $0x8] sm:$0xff]
    %vm489 = vcmask 130048
    %v491 = vsel %vm489, %v487, 0
    %v494 = vsel %vm489, %v488, 0
    %496 = vmatpush.msra.mxu0 0.0
    %497 = vmatpush.msra.mxu0 0.0
    %498 = vmatpush.msra.mxu0 0.0
    %499 = vmatpush.msra.mxu0 0.0
    %500 = vmatpush.msra.mxu0 0.0
    %501 = vmatpush.msra.mxu0 0.0
    %502 = vmatpush.msra.mxu0 0.0
    %503 = vmatpush.msra.mxu0 0.0
    %504 = vmatpush.msra.mxu0 0.0
    %505 = vmatpush.msra.mxu0 0.0
    %506 = vmatpush.msra.mxu0 0.0
    %507 = vmatpush.msra.mxu0 0.0
    %508 = vmatpush.msra.mxu0 0.0
    %509 = vmatpush.msra.mxu0 0.0
    %510 = vmatpush.msra.mxu0 %v439
    %511 = vmatpush.msra.mxu0 %v436
    %512 = vmatmul.f32.gmra.mxu0 %v491
    %v513 = vpop.f32.mrf.mxu0
    %v514 = vadd.f32 %v459, %v513
    %515 = vmatmul.f32.gmra.mxu0 %v494
    %v516 = vpop.f32.mrf.mxu0
    %v517 = vadd.f32 %v462, %v516
    %518 = vdwg.mxu0
    %v519 = vld [vmem:[#allocation11] sm:$0xff]
    %v520 = vld [vmem:[#allocation11 + $0x8] sm:$0xff]
    %v522 = vsel %vm489, %v519, 0
    %v525 = vsel %vm489, %v520, 0
    %527 = vmatpush.msra.mxu0 0.0
    %528 = vmatpush.msra.mxu0 0.0
    %529 = vmatpush.msra.mxu0 0.0
    %530 = vmatpush.msra.mxu0 0.0
    %531 = vmatpush.msra.mxu0 0.0
    %532 = vmatpush.msra.mxu0 0.0
    %533 = vmatpush.msra.mxu0 0.0
    %534 = vmatpush.msra.mxu0 0.0
    %535 = vmatpush.msra.mxu0 0.0
    %536 = vmatpush.msra.mxu0 0.0
    %537 = vmatpush.msra.mxu0 0.0
    %538 = vmatpush.msra.mxu0 0.0
    %539 = vmatpush.msra.mxu0 0.0
    %540 = vmatpush.msra.mxu0 0.0
    %541 = vmatpush.msra.mxu0 %v485
    %542 = vmatpush.msra.mxu0 %v482
    %543 = vmatmul.f32.gmra.mxu0 %v522
    %v544 = vpop.f32.mrf.mxu0
    %v545 = vadd.f32 0.0, %v544
    %546 = vmatmul.f32.gmra.mxu0 %v525
    %v547 = vpop.f32.mrf.mxu0
    %v548 = vadd.f32 0.0, %v547
    %549 = vdwg.mxu0
    %v550 = vadd.f32 %v514, %v545
    %v551 = vadd.f32 %v517, %v548
    %v552 = vld [vmem:[#allocation14] sm:$0x1]
    %v554 = vperm.slane %v552, 0
    %v556 = vadd.f32 %v550, %v554
    %v557 = vadd.f32 %v551, %v554
    %v558 = vmax.f32 %v556, 0.0
    %v559 = vmax.f32 %v557, 0.0
    %v560 = vld [vmem:[#allocation16] sm:$0xff]
    %v562 = vsel %vm489, %v560, 0
    %564 = vmatpush.msra.mxu0 0.0
    %565 = vmatpush.msra.mxu0 0.0
    %566 = vmatpush.msra.mxu0 0.0
    %567 = vmatpush.msra.mxu0 0.0
    %568 = vmatpush.msra.mxu0 0.0
    %569 = vmatpush.msra.mxu0 0.0
    %570 = vmatpush.msra.mxu0 0.0
    %571 = vmatpush.msra.mxu0 0.0
    %572 = vmatpush.msra.mxu0 0.0
    %573 = vmatpush.msra.mxu0 0.0
    %574 = vmatpush.msra.mxu0 0.0
    %575 = vmatpush.msra.mxu0 0.0
    %576 = vmatpush.msra.mxu0 0.0
    %577 = vmatpush.msra.mxu0 0.0
    %578 = vmatpush.msra.mxu0 %v559
    %579 = vmatpush.msra.mxu0 %v558
    %580 = vmatmul.f32.gmra.mxu0 %v562
    %v581 = vpop.f32.mrf.mxu0
    %v582 = vadd.f32 0.0, %v581
    %583 = vdwg.mxu0
    %v584 = vld [vmem:[#allocation17] sm:$0xff]
    %v586 = vsel %vm489, %v584, 0
    %588 = vmatpush.msra.mxu0 0.0
    %589 = vmatpush.msra.mxu0 0.0
    %590 = vmatpush.msra.mxu0 0.0
    %591 = vmatpush.msra.mxu0 0.0
    %592 = vmatpush.msra.mxu0 0.0
    %593 = vmatpush.msra.mxu0 0.0
    %594 = vmatpush.msra.mxu0 0.0
    %595 = vmatpush.msra.mxu0 0.0
    %596 = vmatpush.msra.mxu0 0.0
    %597 = vmatpush.msra.mxu0 0.0
    %598 = vmatpush.msra.mxu0 0.0
    %599 = vmatpush.msra.mxu0 0.0
    %600 = vmatpush.msra.mxu0 0.0
    %601 = vmatpush.msra.mxu0 0.0
    %602 = vmatpush.msra.mxu0 %v559
    %603 = vmatpush.msra.mxu0 %v558
    %604 = vmatmul.f32.gmra.mxu0 %v586
    %v605 = vpop.f32.mrf.mxu0
    %v606 = vadd.f32 0.0, %v605
    %607 = vdwg.mxu0
    %v608 = vmax.f32 %v582, %v606
    %v609 = vld [vmem:[#allocation19] sm:$0x3]
    %vm610 = vcmask 64512
    %v612 = vsel %vm610, %v609, 0
    %614 = vmatpush.msra.mxu0 0.0
    %615 = vmatpush.msra.mxu0 0.0
    %616 = vmatpush.msra.mxu0 0.0
    %617 = vmatpush.msra.mxu0 0.0
    %618 = vmatpush.msra.mxu0 0.0
    %619 = vmatpush.msra.mxu0 0.0
    %620 = vmatpush.msra.mxu0 0.0
    %621 = vmatpush.msra.mxu0 0.0
    %622 = vmatpush.msra.mxu0 0.0
    %623 = vmatpush.msra.mxu0 0.0
    %624 = vmatpush.msra.mxu0 0.0
    %625 = vmatpush.msra.mxu0 0.0
    %626 = vmatpush.msra.mxu0 0.0
    %627 = vmatpush.msra.mxu0 0.0
    %628 = vmatpush.msra.mxu0 0.0
    %629 = vmatpush.msra.mxu0 %v608
    %630 = vmatmul.f32.gmra.mxu0 %v612
    %v631 = vpop.f32.mrf.mxu0
    %v632 = vadd.f32 0.0, %v631
    %633 = vdwg.mxu0
    %v634 = vld [vmem:[#allocation20] sm:$0xff]
    %v635 = vld [vmem:[#allocation20 + $0x8] sm:$0xff]
    %v636 = vld [vmem:[#allocation20 + $0x10] sm:$0xff]
    %v637 = vld [vmem:[#allocation20 + $0x18] sm:$0xff]
    %v638 = vld [vmem:[#allocation20 + $0x20] sm:$0xff]
    %v639 = vld [vmem:[#allocation20 + $0x28] sm:$0xff]
    %v640 = vld [vmem:[#allocation20 + $0x30] sm:$0xff]
    %v641 = vld [vmem:[#allocation20 + $0x38] sm:$0xff]
    %v642 = vld [vmem:[#allocation20 + $0x40] sm:$0xff]
    %v643 = vld [vmem:[#allocation20 + $0x48] sm:$0xff]
    %v644 = vld [vmem:[#allocation20 + $0x50] sm:$0xff]
    %v645 = vld [vmem:[#allocation20 + $0x58] sm:$0xff]
    %v646 = vld [vmem:[#allocation20 + $0x60] sm:$0xff]
    %v647 = vld [vmem:[#allocation20 + $0x68] sm:$0xff]
    %v648 = vld [vmem:[#allocation20 + $0x70] sm:$0xff]
    %v649 = vld [vmem:[#allocation20 + $0x78] sm:$0xff]
    %v650 = vld [vmem:[#allocation20 + $0x80] sm:$0xff]
    %v651 = vld [vmem:[#allocation20 + $0x88] sm:$0xff]
    %v652 = vld [vmem:[#allocation20 + $0x90] sm:$0xff]
    %v653 = vld [vmem:[#allocation20 + $0x98] sm:$0xff]
    %v654 = vld [vmem:[#allocation20 + $0xa0] sm:$0xff]
    %v655 = vld [vmem:[#allocation20 + $0xa8] sm:$0xff]
    %v656 = vld [vmem:[#allocation20 + $0xb0] sm:$0xff]
    %v657 = vld [vmem:[#allocation20 + $0xb8] sm:$0xff]
    %v658 = vld [vmem:[#allocation20 + $0xc0] sm:$0xff]
    %v659 = vld [vmem:[#allocation20 + $0xc8] sm:$0xff]
    %v660 = vld [vmem:[#allocation20 + $0xd0] sm:$0xff]
    %v661 = vld [vmem:[#allocation20 + $0xd8] sm:$0xff]
    %v662 = vld [vmem:[#allocation20 + $0xe0] sm:$0xff]
    %v663 = vld [vmem:[#allocation20 + $0xe8] sm:$0xff]
    %v664 = vld [vmem:[#allocation20 + $0xf0] sm:$0xff]
    %v665 = vld [vmem:[#allocation20 + $0xf8] sm:$0xff]
    %v666 = vld [vmem:[#allocation20 + $0x100] sm:$0xff]
    %v667 = vld [vmem:[#allocation20 + $0x108] sm:$0xff]
    %v668 = vld [vmem:[#allocation20 + $0x110] sm:$0xff]
    %v669 = vld [vmem:[#allocation20 + $0x118] sm:$0xff]
    %v670 = vld [vmem:[#allocation20 + $0x120] sm:$0xff]
    %v671 = vld [vmem:[#allocation20 + $0x128] sm:$0xff]
    %v672 = vld [vmem:[#allocation20 + $0x130] sm:$0xff]
    %v673 = vld [vmem:[#allocation20 + $0x138] sm:$0xff]
    %v674 = vld [vmem:[#allocation20 + $0x140] sm:$0xff]
    %v675 = vld [vmem:[#allocation20 + $0x148] sm:$0xff]
    %v676 = vld [vmem:[#allocation20 + $0x150] sm:$0xff]
    %v677 = vld [vmem:[#allocation20 + $0x158] sm:$0xff]
    %v678 = vld [vmem:[#allocation20 + $0x160] sm:$0xff]
    %v679 = vld [vmem:[#allocation20 + $0x168] sm:$0xff]
    %v680 = vld [vmem:[#allocation20 + $0x170] sm:$0xff]
    %v681 = vld [vmem:[#allocation20 + $0x178] sm:$0xff]
    %v682 = vld [vmem:[#allocation20 + $0x180] sm:$0xff]
    %v683 = vld [vmem:[#allocation20 + $0x188] sm:$0xff]
    %v684 = vld [vmem:[#allocation20 + $0x190] sm:$0xff]
    %v685 = vld [vmem:[#allocation20 + $0x198] sm:$0xff]
    %v686 = vld [vmem:[#allocation20 + $0x1a0] sm:$0xff]
    %v687 = vld [vmem:[#allocation20 + $0x1a8] sm:$0xff]
    %v688 = vld [vmem:[#allocation20 + $0x1b0] sm:$0xff]
    %v689 = vld [vmem:[#allocation20 + $0x1b8] sm:$0xff]
    %v690 = vld [vmem:[#allocation20 + $0x1c0] sm:$0xff]
    %v691 = vld [vmem:[#allocation20 + $0x1c8] sm:$0xff]
    %v692 = vld [vmem:[#allocation20 + $0x1d0] sm:$0xff]
    %v693 = vld [vmem:[#allocation20 + $0x1d8] sm:$0xff]
    %v694 = vld [vmem:[#allocation20 + $0x1e0] sm:$0xff]
    %v695 = vld [vmem:[#allocation20 + $0x1e8] sm:$0xff]
    %v696 = vld [vmem:[#allocation20 + $0x1f0] sm:$0xff]
    %v697 = vld [vmem:[#allocation20 + $0x1f8] sm:$0xff]
    %v698 = vld [vmem:[#allocation20 + $0x200] sm:$0xff]
    %v699 = vld [vmem:[#allocation20 + $0x208] sm:$0xff]
    %v700 = vld [vmem:[#allocation20 + $0x210] sm:$0xff]
    %v701 = vld [vmem:[#allocation20 + $0x218] sm:$0xff]
    %v702 = vld [vmem:[#allocation20 + $0x220] sm:$0xff]
    %v703 = vld [vmem:[#allocation20 + $0x228] sm:$0xff]
    %v704 = vld [vmem:[#allocation20 + $0x230] sm:$0xff]
    %v705 = vld [vmem:[#allocation20 + $0x238] sm:$0xff]
    %v706 = vld [vmem:[#allocation20 + $0x240] sm:$0xff]
    %v707 = vld [vmem:[#allocation20 + $0x248] sm:$0xff]
    %v708 = vld [vmem:[#allocation20 + $0x250] sm:$0xff]
    %v709 = vld [vmem:[#allocation20 + $0x258] sm:$0xff]
    %v710 = vld [vmem:[#allocation20 + $0x260] sm:$0xff]
    %v711 = vld [vmem:[#allocation20 + $0x268] sm:$0xff]
    %v712 = vld [vmem:[#allocation20 + $0x270] sm:$0xff]
    %v713 = vld [vmem:[#allocation20 + $0x278] sm:$0xff]
    %v714 = vld [vmem:[#allocation20 + $0x280] sm:$0xff]
    %v715 = vld [vmem:[#allocation20 + $0x288] sm:$0xff]
    %v716 = vld [vmem:[#allocation20 + $0x290] sm:$0xff]
    %v717 = vld [vmem:[#allocation20 + $0x298] sm:$0xff]
    %v718 = vld [vmem:[#allocation20 + $0x2a0] sm:$0xff]
    %v719 = vld [vmem:[#allocation20 + $0x2a8] sm:$0xff]
    %v720 = vld [vmem:[#allocation20 + $0x2b0] sm:$0xff]
    %v721 = vld [vmem:[#allocation20 + $0x2b8] sm:$0xff]
    %v722 = vld [vmem:[#allocation20 + $0x2c0] sm:$0xff]
    %v723 = vld [vmem:[#allocation20 + $0x2c8] sm:$0xff]
    %v724 = vld [vmem:[#allocation20 + $0x2d0] sm:$0xff]
    %v725 = vld [vmem:[#allocation20 + $0x2d8] sm:$0xff]
    %v726 = vld [vmem:[#allocation20 + $0x2e0] sm:$0xff]
    %v727 = vld [vmem:[#allocation20 + $0x2e8] sm:$0xff]
    %v728 = vld [vmem:[#allocation20 + $0x2f0] sm:$0xff]
    %v729 = vld [vmem:[#allocation20 + $0x2f8] sm:$0xff]
    %v730 = vld [vmem:[#allocation20 + $0x300] sm:$0xff]
    %v731 = vld [vmem:[#allocation20 + $0x308] sm:$0xff]
    %v732 = vld [vmem:[#allocation20 + $0x310] sm:$0xff]
    %v733 = vld [vmem:[#allocation20 + $0x318] sm:$0xff]
    %v734 = vld [vmem:[#allocation20 + $0x320] sm:$0xff]
    %v735 = vld [vmem:[#allocation20 + $0x328] sm:$0xff]
    %v736 = vld [vmem:[#allocation20 + $0x330] sm:$0xff]
    %v737 = vld [vmem:[#allocation20 + $0x338] sm:$0xff]
    %v738 = vld [vmem:[#allocation20 + $0x340] sm:$0xff]
    %v739 = vld [vmem:[#allocation20 + $0x348] sm:$0xff]
    %v740 = vld [vmem:[#allocation20 + $0x350] sm:$0xff]
    %v741 = vld [vmem:[#allocation20 + $0x358] sm:$0xff]
    %v742 = vld [vmem:[#allocation20 + $0x360] sm:$0xff]
    %v743 = vld [vmem:[#allocation20 + $0x368] sm:$0xff]
    %v744 = vld [vmem:[#allocation20 + $0x370] sm:$0xff]
    %v745 = vld [vmem:[#allocation20 + $0x378] sm:$0xff]
    %v746 = vld [vmem:[#allocation20 + $0x380] sm:$0xff]
    %v747 = vld [vmem:[#allocation20 + $0x388] sm:$0xff]
    %v748 = vld [vmem:[#allocation20 + $0x390] sm:$0xff]
    %v749 = vld [vmem:[#allocation20 + $0x398] sm:$0xff]
    %v750 = vld [vmem:[#allocation20 + $0x3a0] sm:$0xff]
    %v751 = vld [vmem:[#allocation20 + $0x3a8] sm:$0xff]
    %v752 = vld [vmem:[#allocation20 + $0x3b0] sm:$0xff]
    %v753 = vld [vmem:[#allocation20 + $0x3b8] sm:$0xff]
    %v754 = vld [vmem:[#allocation20 + $0x3c0] sm:$0xff]
    %v755 = vld [vmem:[#allocation20 + $0x3c8] sm:$0xff]
    %v756 = vld [vmem:[#allocation20 + $0x3d0] sm:$0xff]
    %v757 = vld [vmem:[#allocation20 + $0x3d8] sm:$0xff]
    %v758 = vld [vmem:[#allocation20 + $0x3e0] sm:$0xff]
    %v759 = vld [vmem:[#allocation20 + $0x3e8] sm:$0xff]
    %v760 = vld [vmem:[#allocation20 + $0x3f0] sm:$0xff]
    %v761 = vld [vmem:[#allocation20 + $0x3f8] sm:$0xff]
    %s762 = scalar_lea.vmem [#allocation19], 2
    %v763 = vld [vmem:[%s762] sm:$0x3]
    %v765 = vsel %vm610, %v763, 0
    %767 = vmatpush.msra.mxu0 0.0
    %768 = vmatpush.msra.mxu0 0.0
    %769 = vmatpush.msra.mxu0 0.0
    %770 = vmatpush.msra.mxu0 0.0
    %771 = vmatpush.msra.mxu0 0.0
    %772 = vmatpush.msra.mxu0 0.0
    %773 = vmatpush.msra.mxu0 0.0
    %774 = vmatpush.msra.mxu0 0.0
    %775 = vmatpush.msra.mxu0 0.0
    %776 = vmatpush.msra.mxu0 0.0
    %777 = vmatpush.msra.mxu0 0.0
    %778 = vmatpush.msra.mxu0 0.0
    %779 = vmatpush.msra.mxu0 0.0
    %780 = vmatpush.msra.mxu0 0.0
    %781 = vmatpush.msra.mxu0 0.0
    %782 = vmatpush.msra.mxu0 %v608
    %783 = vmatmul.f32.gmra.mxu0 %v765
    %v784 = vpop.f32.mrf.mxu0
    %v785 = vadd.f32 0.0, %v784
    %786 = vdwg.mxu0
    %s787 = scalar_lea.vmem [#allocation20], 1024
    %v788 = vld [vmem:[%s787] sm:$0xff]
    %v789 = vld [vmem:[%s787 + $0x8] sm:$0xff]
    %v790 = vld [vmem:[%s787 + $0x10] sm:$0xff]
    %v791 = vld [vmem:[%s787 + $0x18] sm:$0xff]
    %v792 = vld [vmem:[%s787 + $0x20] sm:$0xff]
    %v793 = vld [vmem:[%s787 + $0x28] sm:$0xff]
    %v794 = vld [vmem:[%s787 + $0x30] sm:$0xff]
    %v795 = vld [vmem:[%s787 + $0x38] sm:$0xff]
    %v796 = vld [vmem:[%s787 + $0x40] sm:$0xff]
    %v797 = vld [vmem:[%s787 + $0x48] sm:$0xff]
    %v798 = vld [vmem:[%s787 + $0x50] sm:$0xff]
    %v799 = vld [vmem:[%s787 + $0x58] sm:$0xff]
    %v800 = vld [vmem:[%s787 + $0x60] sm:$0xff]
    %v801 = vld [vmem:[%s787 + $0x68] sm:$0xff]
    %v802 = vld [vmem:[%s787 + $0x70] sm:$0xff]
    %v803 = vld [vmem:[%s787 + $0x78] sm:$0xff]
    %v804 = vld [vmem:[%s787 + $0x80] sm:$0xff]
    %v805 = vld [vmem:[%s787 + $0x88] sm:$0xff]
    %v806 = vld [vmem:[%s787 + $0x90] sm:$0xff]
    %v807 = vld [vmem:[%s787 + $0x98] sm:$0xff]
    %v808 = vld [vmem:[%s787 + $0xa0] sm:$0xff]
    %v809 = vld [vmem:[%s787 + $0xa8] sm:$0xff]
    %v810 = vld [vmem:[%s787 + $0xb0] sm:$0xff]
    %v811 = vld [vmem:[%s787 + $0xb8] sm:$0xff]
    %v812 = vld [vmem:[%s787 + $0xc0] sm:$0xff]
    %v813 = vld [vmem:[%s787 + $0xc8] sm:$0xff]
    %v814 = vld [vmem:[%s787 + $0xd0] sm:$0xff]
    %v815 = vld [vmem:[%s787 + $0xd8] sm:$0xff]
    %v816 = vld [vmem:[%s787 + $0xe0] sm:$0xff]
    %v817 = vld [vmem:[%s787 + $0xe8] sm:$0xff]
    %v818 = vld [vmem:[%s787 + $0xf0] sm:$0xff]
    %v819 = vld [vmem:[%s787 + $0xf8] sm:$0xff]
    %v820 = vld [vmem:[%s787 + $0x100] sm:$0xff]
    %v821 = vld [vmem:[%s787 + $0x108] sm:$0xff]
    %v822 = vld [vmem:[%s787 + $0x110] sm:$0xff]
    %v823 = vld [vmem:[%s787 + $0x118] sm:$0xff]
    %v824 = vld [vmem:[%s787 + $0x120] sm:$0xff]
    %v825 = vld [vmem:[%s787 + $0x128] sm:$0xff]
    %v826 = vld [vmem:[%s787 + $0x130] sm:$0xff]
    %v827 = vld [vmem:[%s787 + $0x138] sm:$0xff]
    %v828 = vld [vmem:[%s787 + $0x140] sm:$0xff]
    %v829 = vld [vmem:[%s787 + $0x148] sm:$0xff]
    %v830 = vld [vmem:[%s787 + $0x150] sm:$0xff]
    %v831 = vld [vmem:[%s787 + $0x158] sm:$0xff]
    %v832 = vld [vmem:[%s787 + $0x160] sm:$0xff]
    %v833 = vld [vmem:[%s787 + $0x168] sm:$0xff]
    %v834 = vld [vmem:[%s787 + $0x170] sm:$0xff]
    %v835 = vld [vmem:[%s787 + $0x178] sm:$0xff]
    %v836 = vld [vmem:[%s787 + $0x180] sm:$0xff]
    %v837 = vld [vmem:[%s787 + $0x188] sm:$0xff]
    %v838 = vld [vmem:[%s787 + $0x190] sm:$0xff]
    %v839 = vld [vmem:[%s787 + $0x198] sm:$0xff]
    %v840 = vld [vmem:[%s787 + $0x1a0] sm:$0xff]
    %v841 = vld [vmem:[%s787 + $0x1a8] sm:$0xff]
    %v842 = vld [vmem:[%s787 + $0x1b0] sm:$0xff]
    %v843 = vld [vmem:[%s787 + $0x1b8] sm:$0xff]
    %v844 = vld [vmem:[%s787 + $0x1c0] sm:$0xff]
    %v845 = vld [vmem:[%s787 + $0x1c8] sm:$0xff]
    %v846 = vld [vmem:[%s787 + $0x1d0] sm:$0xff]
    %v847 = vld [vmem:[%s787 + $0x1d8] sm:$0xff]
    %v848 = vld [vmem:[%s787 + $0x1e0] sm:$0xff]
    %v849 = vld [vmem:[%s787 + $0x1e8] sm:$0xff]
    %v850 = vld [vmem:[%s787 + $0x1f0] sm:$0xff]
    %v851 = vld [vmem:[%s787 + $0x1f8] sm:$0xff]
    %v852 = vld [vmem:[%s787 + $0x200] sm:$0xff]
    %v853 = vld [vmem:[%s787 + $0x208] sm:$0xff]
    %v854 = vld [vmem:[%s787 + $0x210] sm:$0xff]
    %v855 = vld [vmem:[%s787 + $0x218] sm:$0xff]
    %v856 = vld [vmem:[%s787 + $0x220] sm:$0xff]
    %v857 = vld [vmem:[%s787 + $0x228] sm:$0xff]
    %v858 = vld [vmem:[%s787 + $0x230] sm:$0xff]
    %v859 = vld [vmem:[%s787 + $0x238] sm:$0xff]
    %v860 = vld [vmem:[%s787 + $0x240] sm:$0xff]
    %v861 = vld [vmem:[%s787 + $0x248] sm:$0xff]
    %v862 = vld [vmem:[%s787 + $0x250] sm:$0xff]
    %v863 = vld [vmem:[%s787 + $0x258] sm:$0xff]
    %v864 = vld [vmem:[%s787 + $0x260] sm:$0xff]
    %v865 = vld [vmem:[%s787 + $0x268] sm:$0xff]
    %v866 = vld [vmem:[%s787 + $0x270] sm:$0xff]
    %v867 = vld [vmem:[%s787 + $0x278] sm:$0xff]
    %v868 = vld [vmem:[%s787 + $0x280] sm:$0xff]
    %v869 = vld [vmem:[%s787 + $0x288] sm:$0xff]
    %v870 = vld [vmem:[%s787 + $0x290] sm:$0xff]
    %v871 = vld [vmem:[%s787 + $0x298] sm:$0xff]
    %v872 = vld [vmem:[%s787 + $0x2a0] sm:$0xff]
    %v873 = vld [vmem:[%s787 + $0x2a8] sm:$0xff]
    %v874 = vld [vmem:[%s787 + $0x2b0] sm:$0xff]
    %v875 = vld [vmem:[%s787 + $0x2b8] sm:$0xff]
    %v876 = vld [vmem:[%s787 + $0x2c0] sm:$0xff]
    %v877 = vld [vmem:[%s787 + $0x2c8] sm:$0xff]
    %v878 = vld [vmem:[%s787 + $0x2d0] sm:$0xff]
    %v879 = vld [vmem:[%s787 + $0x2d8] sm:$0xff]
    %v880 = vld [vmem:[%s787 + $0x2e0] sm:$0xff]
    %v881 = vld [vmem:[%s787 + $0x2e8] sm:$0xff]
    %v882 = vld [vmem:[%s787 + $0x2f0] sm:$0xff]
    %v883 = vld [vmem:[%s787 + $0x2f8] sm:$0xff]
    %v884 = vld [vmem:[%s787 + $0x300] sm:$0xff]
    %v885 = vld [vmem:[%s787 + $0x308] sm:$0xff]
    %v886 = vld [vmem:[%s787 + $0x310] sm:$0xff]
    %v887 = vld [vmem:[%s787 + $0x318] sm:$0xff]
    %v888 = vld [vmem:[%s787 + $0x320] sm:$0xff]
    %v889 = vld [vmem:[%s787 + $0x328] sm:$0xff]
    %v890 = vld [vmem:[%s787 + $0x330] sm:$0xff]
    %v891 = vld [vmem:[%s787 + $0x338] sm:$0xff]
    %v892 = vld [vmem:[%s787 + $0x340] sm:$0xff]
    %v893 = vld [vmem:[%s787 + $0x348] sm:$0xff]
    %v894 = vld [vmem:[%s787 + $0x350] sm:$0xff]
    %v895 = vld [vmem:[%s787 + $0x358] sm:$0xff]
    %v896 = vld [vmem:[%s787 + $0x360] sm:$0xff]
    %v897 = vld [vmem:[%s787 + $0x368] sm:$0xff]
    %v898 = vld [vmem:[%s787 + $0x370] sm:$0xff]
    %v899 = vld [vmem:[%s787 + $0x378] sm:$0xff]
    %v900 = vld [vmem:[%s787 + $0x380] sm:$0xff]
    %v901 = vld [vmem:[%s787 + $0x388] sm:$0xff]
    %v902 = vld [vmem:[%s787 + $0x390] sm:$0xff]
    %v903 = vld [vmem:[%s787 + $0x398] sm:$0xff]
    %v904 = vld [vmem:[%s787 + $0x3a0] sm:$0xff]
    %v905 = vld [vmem:[%s787 + $0x3a8] sm:$0xff]
    %v906 = vld [vmem:[%s787 + $0x3b0] sm:$0xff]
    %v907 = vld [vmem:[%s787 + $0x3b8] sm:$0xff]
    %v908 = vld [vmem:[%s787 + $0x3c0] sm:$0xff]
    %v909 = vld [vmem:[%s787 + $0x3c8] sm:$0xff]
    %v910 = vld [vmem:[%s787 + $0x3d0] sm:$0xff]
    %v911 = vld [vmem:[%s787 + $0x3d8] sm:$0xff]
    %v912 = vld [vmem:[%s787 + $0x3e0] sm:$0xff]
    %v913 = vld [vmem:[%s787 + $0x3e8] sm:$0xff]
    %v914 = vld [vmem:[%s787 + $0x3f0] sm:$0xff]
    %v915 = vld [vmem:[%s787 + $0x3f8] sm:$0xff]
    %916 = vmatpush.msra.mxu0 %v908
    %917 = vmatpush.msra.mxu0 %v900
    %918 = vmatpush.msra.mxu0 %v892
    %919 = vmatpush.msra.mxu0 %v884
    %920 = vmatpush.msra.mxu0 %v876
    %921 = vmatpush.msra.mxu0 %v868
    %922 = vmatpush.msra.mxu0 %v860
    %923 = vmatpush.msra.mxu0 %v852
    %924 = vmatpush.msra.mxu0 %v844
    %925 = vmatpush.msra.mxu0 %v836
    %926 = vmatpush.msra.mxu0 %v828
    %927 = vmatpush.msra.mxu0 %v820
    %928 = vmatpush.msra.mxu0 %v812
    %929 = vmatpush.msra.mxu0 %v804
    %930 = vmatpush.msra.mxu0 %v796
    %931 = vmatpush.msra.mxu0 %v788
    %932 = vmatmul.f32.gmra.mxu0 %v785
    %v933 = vpop.f32.mrf.mxu0
    %v934 = vadd.f32 0.0, %v933
    %935 = vdwg.mxu0
    %936 = vmatpush.msra.mxu0 %v909
    %937 = vmatpush.msra.mxu0 %v901
    %938 = vmatpush.msra.mxu0 %v893
    %939 = vmatpush.msra.mxu0 %v885
    %940 = vmatpush.msra.mxu0 %v877
    %941 = vmatpush.msra.mxu0 %v869
    %942 = vmatpush.msra.mxu0 %v861
    %943 = vmatpush.msra.mxu0 %v853
    %944 = vmatpush.msra.mxu0 %v845
    %945 = vmatpush.msra.mxu0 %v837
    %946 = vmatpush.msra.mxu0 %v829
    %947 = vmatpush.msra.mxu0 %v821
    %948 = vmatpush.msra.mxu0 %v813
    %949 = vmatpush.msra.mxu0 %v805
    %950 = vmatpush.msra.mxu0 %v797
    %951 = vmatpush.msra.mxu0 %v789
    %952 = vmatmul.f32.gmra.mxu0 %v785
    %v953 = vpop.f32.mrf.mxu0
    %v954 = vadd.f32 0.0, %v953
    %955 = vdwg.mxu0
    %956 = vmatpush.msra.mxu0 %v910
    %957 = vmatpush.msra.mxu0 %v902
    %958 = vmatpush.msra.mxu0 %v894
    %959 = vmatpush.msra.mxu0 %v886
    %960 = vmatpush.msra.mxu0 %v878
    %961 = vmatpush.msra.mxu0 %v870
    %962 = vmatpush.msra.mxu0 %v862
    %963 = vmatpush.msra.mxu0 %v854
    %964 = vmatpush.msra.mxu0 %v846
    %965 = vmatpush.msra.mxu0 %v838
    %966 = vmatpush.msra.mxu0 %v830
    %967 = vmatpush.msra.mxu0 %v822
    %968 = vmatpush.msra.mxu0 %v814
    %969 = vmatpush.msra.mxu0 %v806
    %970 = vmatpush.msra.mxu0 %v798
    %971 = vmatpush.msra.mxu0 %v790
    %972 = vmatmul.f32.gmra.mxu0 %v785
    %v973 = vpop.f32.mrf.mxu0
    %v974 = vadd.f32 0.0, %v973
    %975 = vdwg.mxu0
    %976 = vmatpush.msra.mxu0 %v911
    %977 = vmatpush.msra.mxu0 %v903
    %978 = vmatpush.msra.mxu0 %v895
    %979 = vmatpush.msra.mxu0 %v887
    %980 = vmatpush.msra.mxu0 %v879
    %981 = vmatpush.msra.mxu0 %v871
    %982 = vmatpush.msra.mxu0 %v863
    %983 = vmatpush.msra.mxu0 %v855
    %984 = vmatpush.msra.mxu0 %v847
    %985 = vmatpush.msra.mxu0 %v839
    %986 = vmatpush.msra.mxu0 %v831
    %987 = vmatpush.msra.mxu0 %v823
    %988 = vmatpush.msra.mxu0 %v815
    %989 = vmatpush.msra.mxu0 %v807
    %990 = vmatpush.msra.mxu0 %v799
    %991 = vmatpush.msra.mxu0 %v791
    %992 = vmatmul.f32.gmra.mxu0 %v785
    %v993 = vpop.f32.mrf.mxu0
    %v994 = vadd.f32 0.0, %v993
    %995 = vdwg.mxu0
    %996 = vmatpush.msra.mxu0 %v912
    %997 = vmatpush.msra.mxu0 %v904
    %998 = vmatpush.msra.mxu0 %v896
    %999 = vmatpush.msra.mxu0 %v888
    %1000 = vmatpush.msra.mxu0 %v880
    %1001 = vmatpush.msra.mxu0 %v872
    %1002 = vmatpush.msra.mxu0 %v864
    %1003 = vmatpush.msra.mxu0 %v856
    %1004 = vmatpush.msra.mxu0 %v848
    %1005 = vmatpush.msra.mxu0 %v840
    %1006 = vmatpush.msra.mxu0 %v832
    %1007 = vmatpush.msra.mxu0 %v824
    %1008 = vmatpush.msra.mxu0 %v816
    %1009 = vmatpush.msra.mxu0 %v808
    %1010 = vmatpush.msra.mxu0 %v800
    %1011 = vmatpush.msra.mxu0 %v792
    %1012 = vmatmul.f32.gmra.mxu0 %v785
    %v1013 = vpop.f32.mrf.mxu0
    %v1014 = vadd.f32 0.0, %v1013
    %1015 = vdwg.mxu0
    %1016 = vmatpush.msra.mxu0 %v913
    %1017 = vmatpush.msra.mxu0 %v905
    %1018 = vmatpush.msra.mxu0 %v897
    %1019 = vmatpush.msra.mxu0 %v889
    %1020 = vmatpush.msra.mxu0 %v881
    %1021 = vmatpush.msra.mxu0 %v873
    %1022 = vmatpush.msra.mxu0 %v865
    %1023 = vmatpush.msra.mxu0 %v857
    %1024 = vmatpush.msra.mxu0 %v849
    %1025 = vmatpush.msra.mxu0 %v841
    %1026 = vmatpush.msra.mxu0 %v833
    %1027 = vmatpush.msra.mxu0 %v825
    %1028 = vmatpush.msra.mxu0 %v817
    %1029 = vmatpush.msra.mxu0 %v809
    %1030 = vmatpush.msra.mxu0 %v801
    %1031 = vmatpush.msra.mxu0 %v793
    %1032 = vmatmul.f32.gmra.mxu0 %v785
    %v1033 = vpop.f32.mrf.mxu0
    %v1034 = vadd.f32 0.0, %v1033
    %1035 = vdwg.mxu0
    %1036 = vmatpush.msra.mxu0 %v914
    %1037 = vmatpush.msra.mxu0 %v906
    %1038 = vmatpush.msra.mxu0 %v898
    %1039 = vmatpush.msra.mxu0 %v890
    %1040 = vmatpush.msra.mxu0 %v882
    %1041 = vmatpush.msra.mxu0 %v874
    %1042 = vmatpush.msra.mxu0 %v866
    %1043 = vmatpush.msra.mxu0 %v858
    %1044 = vmatpush.msra.mxu0 %v850
    %1045 = vmatpush.msra.mxu0 %v842
    %1046 = vmatpush.msra.mxu0 %v834
    %1047 = vmatpush.msra.mxu0 %v826
    %1048 = vmatpush.msra.mxu0 %v818
    %1049 = vmatpush.msra.mxu0 %v810
    %1050 = vmatpush.msra.mxu0 %v802
    %1051 = vmatpush.msra.mxu0 %v794
    %1052 = vmatmul.f32.gmra.mxu0 %v785
    %v1053 = vpop.f32.mrf.mxu0
    %v1054 = vadd.f32 0.0, %v1053
    %1055 = vdwg.mxu0
    %1056 = vmatpush.msra.mxu0 %v915
    %1057 = vmatpush.msra.mxu0 %v907
    %1058 = vmatpush.msra.mxu0 %v899
    %1059 = vmatpush.msra.mxu0 %v891
    %1060 = vmatpush.msra.mxu0 %v883
    %1061 = vmatpush.msra.mxu0 %v875
    %1062 = vmatpush.msra.mxu0 %v867
    %1063 = vmatpush.msra.mxu0 %v859
    %1064 = vmatpush.msra.mxu0 %v851
    %1065 = vmatpush.msra.mxu0 %v843
    %1066 = vmatpush.msra.mxu0 %v835
    %1067 = vmatpush.msra.mxu0 %v827
    %1068 = vmatpush.msra.mxu0 %v819
    %1069 = vmatpush.msra.mxu0 %v811
    %1070 = vmatpush.msra.mxu0 %v803
    %1071 = vmatpush.msra.mxu0 %v795
    %1072 = vmatmul.f32.gmra.mxu0 %v785
    %v1073 = vpop.f32.mrf.mxu0
    %v1074 = vadd.f32 0.0, %v1073
    %1075 = vdwg.mxu0
    %1076 = vmatpush.msra.mxu0 %v754
    %1077 = vmatpush.msra.mxu0 %v746
    %1078 = vmatpush.msra.mxu0 %v738
    %1079 = vmatpush.msra.mxu0 %v730
    %1080 = vmatpush.msra.mxu0 %v722
    %1081 = vmatpush.msra.mxu0 %v714
    %1082 = vmatpush.msra.mxu0 %v706
    %1083 = vmatpush.msra.mxu0 %v698
    %1084 = vmatpush.msra.mxu0 %v690
    %1085 = vmatpush.msra.mxu0 %v682
    %1086 = vmatpush.msra.mxu0 %v674
    %1087 = vmatpush.msra.mxu0 %v666
    %1088 = vmatpush.msra.mxu0 %v658
    %1089 = vmatpush.msra.mxu0 %v650
    %1090 = vmatpush.msra.mxu0 %v642
    %1091 = vmatpush.msra.mxu0 %v634
    %1092 = vmatmul.f32.gmra.mxu0 %v632
    %v1093 = vpop.f32.mrf.mxu0
    %v1094 = vadd.f32 %v934, %v1093
    %1095 = vdwg.mxu0
    %1096 = vmatpush.msra.mxu0 %v755
    %1097 = vmatpush.msra.mxu0 %v747
    %1098 = vmatpush.msra.mxu0 %v739
    %1099 = vmatpush.msra.mxu0 %v731
    %1100 = vmatpush.msra.mxu0 %v723
    %1101 = vmatpush.msra.mxu0 %v715
    %1102 = vmatpush.msra.mxu0 %v707
    %1103 = vmatpush.msra.mxu0 %v699
    %1104 = vmatpush.msra.mxu0 %v691
    %1105 = vmatpush.msra.mxu0 %v683
    %1106 = vmatpush.msra.mxu0 %v675
    %1107 = vmatpush.msra.mxu0 %v667
    %1108 = vmatpush.msra.mxu0 %v659
    %1109 = vmatpush.msra.mxu0 %v651
    %1110 = vmatpush.msra.mxu0 %v643
    %1111 = vmatpush.msra.mxu0 %v635
    %1112 = vmatmul.f32.gmra.mxu0 %v632
    %v1113 = vpop.f32.mrf.mxu0
    %v1114 = vadd.f32 %v954, %v1113
    %1115 = vdwg.mxu0
    %1116 = vmatpush.msra.mxu0 %v756
    %1117 = vmatpush.msra.mxu0 %v748
    %1118 = vmatpush.msra.mxu0 %v740
    %1119 = vmatpush.msra.mxu0 %v732
    %1120 = vmatpush.msra.mxu0 %v724
    %1121 = vmatpush.msra.mxu0 %v716
    %1122 = vmatpush.msra.mxu0 %v708
    %1123 = vmatpush.msra.mxu0 %v700
    %1124 = vmatpush.msra.mxu0 %v692
    %1125 = vmatpush.msra.mxu0 %v684
    %1126 = vmatpush.msra.mxu0 %v676
    %1127 = vmatpush.msra.mxu0 %v668
    %1128 = vmatpush.msra.mxu0 %v660
    %1129 = vmatpush.msra.mxu0 %v652
    %1130 = vmatpush.msra.mxu0 %v644
    %1131 = vmatpush.msra.mxu0 %v636
    %1132 = vmatmul.f32.gmra.mxu0 %v632
    %v1133 = vpop.f32.mrf.mxu0
    %v1134 = vadd.f32 %v974, %v1133
    %1135 = vdwg.mxu0
    %1136 = vmatpush.msra.mxu0 %v757
    %1137 = vmatpush.msra.mxu0 %v749
    %1138 = vmatpush.msra.mxu0 %v741
    %1139 = vmatpush.msra.mxu0 %v733
    %1140 = vmatpush.msra.mxu0 %v725
    %1141 = vmatpush.msra.mxu0 %v717
    %1142 = vmatpush.msra.mxu0 %v709
    %1143 = vmatpush.msra.mxu0 %v701
    %1144 = vmatpush.msra.mxu0 %v693
    %1145 = vmatpush.msra.mxu0 %v685
    %1146 = vmatpush.msra.mxu0 %v677
    %1147 = vmatpush.msra.mxu0 %v669
    %1148 = vmatpush.msra.mxu0 %v661
    %1149 = vmatpush.msra.mxu0 %v653
    %1150 = vmatpush.msra.mxu0 %v645
    %1151 = vmatpush.msra.mxu0 %v637
    %1152 = vmatmul.f32.gmra.mxu0 %v632
    %v1153 = vpop.f32.mrf.mxu0
    %v1154 = vadd.f32 %v994, %v1153
    %1155 = vdwg.mxu0
    %1156 = vmatpush.msra.mxu0 %v758
    %1157 = vmatpush.msra.mxu0 %v750
    %1158 = vmatpush.msra.mxu0 %v742
    %1159 = vmatpush.msra.mxu0 %v734
    %1160 = vmatpush.msra.mxu0 %v726
    %1161 = vmatpush.msra.mxu0 %v718
    %1162 = vmatpush.msra.mxu0 %v710
    %1163 = vmatpush.msra.mxu0 %v702
    %1164 = vmatpush.msra.mxu0 %v694
    %1165 = vmatpush.msra.mxu0 %v686
    %1166 = vmatpush.msra.mxu0 %v678
    %1167 = vmatpush.msra.mxu0 %v670
    %1168 = vmatpush.msra.mxu0 %v662
    %1169 = vmatpush.msra.mxu0 %v654
    %1170 = vmatpush.msra.mxu0 %v646
    %1171 = vmatpush.msra.mxu0 %v638
    %1172 = vmatmul.f32.gmra.mxu0 %v632
    %v1173 = vpop.f32.mrf.mxu0
    %v1174 = vadd.f32 %v1014, %v1173
    %1175 = vdwg.mxu0
    %1176 = vmatpush.msra.mxu0 %v759
    %1177 = vmatpush.msra.mxu0 %v751
    %1178 = vmatpush.msra.mxu0 %v743
    %1179 = vmatpush.msra.mxu0 %v735
    %1180 = vmatpush.msra.mxu0 %v727
    %1181 = vmatpush.msra.mxu0 %v719
    %1182 = vmatpush.msra.mxu0 %v711
    %1183 = vmatpush.msra.mxu0 %v703
    %1184 = vmatpush.msra.mxu0 %v695
    %1185 = vmatpush.msra.mxu0 %v687
    %1186 = vmatpush.msra.mxu0 %v679
    %1187 = vmatpush.msra.mxu0 %v671
    %1188 = vmatpush.msra.mxu0 %v663
    %1189 = vmatpush.msra.mxu0 %v655
    %1190 = vmatpush.msra.mxu0 %v647
    %1191 = vmatpush.msra.mxu0 %v639
    %1192 = vmatmul.f32.gmra.mxu0 %v632
    %v1193 = vpop.f32.mrf.mxu0
    %v1194 = vadd.f32 %v1034, %v1193
    %1195 = vdwg.mxu0
    %1196 = vmatpush.msra.mxu0 %v760
    %1197 = vmatpush.msra.mxu0 %v752
    %1198 = vmatpush.msra.mxu0 %v744
    %1199 = vmatpush.msra.mxu0 %v736
    %1200 = vmatpush.msra.mxu0 %v728
    %1201 = vmatpush.msra.mxu0 %v720
    %1202 = vmatpush.msra.mxu0 %v712
    %1203 = vmatpush.msra.mxu0 %v704
    %1204 = vmatpush.msra.mxu0 %v696
    %1205 = vmatpush.msra.mxu0 %v688
    %1206 = vmatpush.msra.mxu0 %v680
    %1207 = vmatpush.msra.mxu0 %v672
    %1208 = vmatpush.msra.mxu0 %v664
    %1209 = vmatpush.msra.mxu0 %v656
    %1210 = vmatpush.msra.mxu0 %v648
    %1211 = vmatpush.msra.mxu0 %v640
    %1212 = vmatmul.f32.gmra.mxu0 %v632
    %v1213 = vpop.f32.mrf.mxu0
    %v1214 = vadd.f32 %v1054, %v1213
    %1215 = vdwg.mxu0
    %1216 = vmatpush.msra.mxu0 %v761
    %1217 = vmatpush.msra.mxu0 %v753
    %1218 = vmatpush.msra.mxu0 %v745
    %1219 = vmatpush.msra.mxu0 %v737
    %1220 = vmatpush.msra.mxu0 %v729
    %1221 = vmatpush.msra.mxu0 %v721
    %1222 = vmatpush.msra.mxu0 %v713
    %1223 = vmatpush.msra.mxu0 %v705
    %1224 = vmatpush.msra.mxu0 %v697
    %1225 = vmatpush.msra.mxu0 %v689
    %1226 = vmatpush.msra.mxu0 %v681
    %1227 = vmatpush.msra.mxu0 %v673
    %1228 = vmatpush.msra.mxu0 %v665
    %1229 = vmatpush.msra.mxu0 %v657
    %1230 = vmatpush.msra.mxu0 %v649
    %1231 = vmatpush.msra.mxu0 %v641
    %1232 = vmatmul.f32.gmra.mxu0 %v632
    %v1233 = vpop.f32.mrf.mxu0
    %v1234 = vadd.f32 %v1074, %v1233
    %1235 = vdwg.mxu0
    %s1236 = scalar_lea.vmem [#allocation19], 4
    %v1237 = vld [vmem:[%s1236] sm:$0x3]
    %v1239 = vsel %vm610, %v1237, 0
    %1241 = vmatpush.msra.mxu0 0.0
    %1242 = vmatpush.msra.mxu0 0.0
    %1243 = vmatpush.msra.mxu0 0.0
    %1244 = vmatpush.msra.mxu0 0.0
    %1245 = vmatpush.msra.mxu0 0.0
    %1246 = vmatpush.msra.mxu0 0.0
    %1247 = vmatpush.msra.mxu0 0.0
    %1248 = vmatpush.msra.mxu0 0.0
    %1249 = vmatpush.msra.mxu0 0.0
    %1250 = vmatpush.msra.mxu0 0.0
    %1251 = vmatpush.msra.mxu0 0.0
    %1252 = vmatpush.msra.mxu0 0.0
    %1253 = vmatpush.msra.mxu0 0.0
    %1254 = vmatpush.msra.mxu0 0.0
    %1255 = vmatpush.msra.mxu0 0.0
    %1256 = vmatpush.msra.mxu0 %v608
    %1257 = vmatmul.f32.gmra.mxu0 %v1239
    %v1258 = vpop.f32.mrf.mxu0
    %v1259 = vadd.f32 0.0, %v1258
    %1260 = vdwg.mxu0
    %s1261 = scalar_lea.vmem [#allocation20], 2048
    %v1262 = vld [vmem:[%s1261] sm:$0xff]
    %v1263 = vld [vmem:[%s1261 + $0x8] sm:$0xff]
    %v1264 = vld [vmem:[%s1261 + $0x10] sm:$0xff]
    %v1265 = vld [vmem:[%s1261 + $0x18] sm:$0xff]
    %v1266 = vld [vmem:[%s1261 + $0x20] sm:$0xff]
    %v1267 = vld [vmem:[%s1261 + $0x28] sm:$0xff]
    %v1268 = vld [vmem:[%s1261 + $0x30] sm:$0xff]
    %v1269 = vld [vmem:[%s1261 + $0x38] sm:$0xff]
    %v1270 = vld [vmem:[%s1261 + $0x40] sm:$0xff]
    %v1271 = vld [vmem:[%s1261 + $0x48] sm:$0xff]
    %v1272 = vld [vmem:[%s1261 + $0x50] sm:$0xff]
    %v1273 = vld [vmem:[%s1261 + $0x58] sm:$0xff]
    %v1274 = vld [vmem:[%s1261 + $0x60] sm:$0xff]
    %v1275 = vld [vmem:[%s1261 + $0x68] sm:$0xff]
    %v1276 = vld [vmem:[%s1261 + $0x70] sm:$0xff]
    %v1277 = vld [vmem:[%s1261 + $0x78] sm:$0xff]
    %v1278 = vld [vmem:[%s1261 + $0x80] sm:$0xff]
    %v1279 = vld [vmem:[%s1261 + $0x88] sm:$0xff]
    %v1280 = vld [vmem:[%s1261 + $0x90] sm:$0xff]
    %v1281 = vld [vmem:[%s1261 + $0x98] sm:$0xff]
    %v1282 = vld [vmem:[%s1261 + $0xa0] sm:$0xff]
    %v1283 = vld [vmem:[%s1261 + $0xa8] sm:$0xff]
    %v1284 = vld [vmem:[%s1261 + $0xb0] sm:$0xff]
    %v1285 = vld [vmem:[%s1261 + $0xb8] sm:$0xff]
    %v1286 = vld [vmem:[%s1261 + $0xc0] sm:$0xff]
    %v1287 = vld [vmem:[%s1261 + $0xc8] sm:$0xff]
    %v1288 = vld [vmem:[%s1261 + $0xd0] sm:$0xff]
    %v1289 = vld [vmem:[%s1261 + $0xd8] sm:$0xff]
    %v1290 = vld [vmem:[%s1261 + $0xe0] sm:$0xff]
    %v1291 = vld [vmem:[%s1261 + $0xe8] sm:$0xff]
    %v1292 = vld [vmem:[%s1261 + $0xf0] sm:$0xff]
    %v1293 = vld [vmem:[%s1261 + $0xf8] sm:$0xff]
    %v1294 = vld [vmem:[%s1261 + $0x100] sm:$0xff]
    %v1295 = vld [vmem:[%s1261 + $0x108] sm:$0xff]
    %v1296 = vld [vmem:[%s1261 + $0x110] sm:$0xff]
    %v1297 = vld [vmem:[%s1261 + $0x118] sm:$0xff]
    %v1298 = vld [vmem:[%s1261 + $0x120] sm:$0xff]
    %v1299 = vld [vmem:[%s1261 + $0x128] sm:$0xff]
    %v1300 = vld [vmem:[%s1261 + $0x130] sm:$0xff]
    %v1301 = vld [vmem:[%s1261 + $0x138] sm:$0xff]
    %v1302 = vld [vmem:[%s1261 + $0x140] sm:$0xff]
    %v1303 = vld [vmem:[%s1261 + $0x148] sm:$0xff]
    %v1304 = vld [vmem:[%s1261 + $0x150] sm:$0xff]
    %v1305 = vld [vmem:[%s1261 + $0x158] sm:$0xff]
    %v1306 = vld [vmem:[%s1261 + $0x160] sm:$0xff]
    %v1307 = vld [vmem:[%s1261 + $0x168] sm:$0xff]
    %v1308 = vld [vmem:[%s1261 + $0x170] sm:$0xff]
    %v1309 = vld [vmem:[%s1261 + $0x178] sm:$0xff]
    %v1310 = vld [vmem:[%s1261 + $0x180] sm:$0xff]
    %v1311 = vld [vmem:[%s1261 + $0x188] sm:$0xff]
    %v1312 = vld [vmem:[%s1261 + $0x190] sm:$0xff]
    %v1313 = vld [vmem:[%s1261 + $0x198] sm:$0xff]
    %v1314 = vld [vmem:[%s1261 + $0x1a0] sm:$0xff]
    %v1315 = vld [vmem:[%s1261 + $0x1a8] sm:$0xff]
    %v1316 = vld [vmem:[%s1261 + $0x1b0] sm:$0xff]
    %v1317 = vld [vmem:[%s1261 + $0x1b8] sm:$0xff]
    %v1318 = vld [vmem:[%s1261 + $0x1c0] sm:$0xff]
    %v1319 = vld [vmem:[%s1261 + $0x1c8] sm:$0xff]
    %v1320 = vld [vmem:[%s1261 + $0x1d0] sm:$0xff]
    %v1321 = vld [vmem:[%s1261 + $0x1d8] sm:$0xff]
    %v1322 = vld [vmem:[%s1261 + $0x1e0] sm:$0xff]
    %v1323 = vld [vmem:[%s1261 + $0x1e8] sm:$0xff]
    %v1324 = vld [vmem:[%s1261 + $0x1f0] sm:$0xff]
    %v1325 = vld [vmem:[%s1261 + $0x1f8] sm:$0xff]
    %v1326 = vld [vmem:[%s1261 + $0x200] sm:$0xff]
    %v1327 = vld [vmem:[%s1261 + $0x208] sm:$0xff]
    %v1328 = vld [vmem:[%s1261 + $0x210] sm:$0xff]
    %v1329 = vld [vmem:[%s1261 + $0x218] sm:$0xff]
    %v1330 = vld [vmem:[%s1261 + $0x220] sm:$0xff]
    %v1331 = vld [vmem:[%s1261 + $0x228] sm:$0xff]
    %v1332 = vld [vmem:[%s1261 + $0x230] sm:$0xff]
    %v1333 = vld [vmem:[%s1261 + $0x238] sm:$0xff]
    %v1334 = vld [vmem:[%s1261 + $0x240] sm:$0xff]
    %v1335 = vld [vmem:[%s1261 + $0x248] sm:$0xff]
    %v1336 = vld [vmem:[%s1261 + $0x250] sm:$0xff]
    %v1337 = vld [vmem:[%s1261 + $0x258] sm:$0xff]
    %v1338 = vld [vmem:[%s1261 + $0x260] sm:$0xff]
    %v1339 = vld [vmem:[%s1261 + $0x268] sm:$0xff]
    %v1340 = vld [vmem:[%s1261 + $0x270] sm:$0xff]
    %v1341 = vld [vmem:[%s1261 + $0x278] sm:$0xff]
    %v1342 = vld [vmem:[%s1261 + $0x280] sm:$0xff]
    %v1343 = vld [vmem:[%s1261 + $0x288] sm:$0xff]
    %v1344 = vld [vmem:[%s1261 + $0x290] sm:$0xff]
    %v1345 = vld [vmem:[%s1261 + $0x298] sm:$0xff]
    %v1346 = vld [vmem:[%s1261 + $0x2a0] sm:$0xff]
    %v1347 = vld [vmem:[%s1261 + $0x2a8] sm:$0xff]
    %v1348 = vld [vmem:[%s1261 + $0x2b0] sm:$0xff]
    %v1349 = vld [vmem:[%s1261 + $0x2b8] sm:$0xff]
    %v1350 = vld [vmem:[%s1261 + $0x2c0] sm:$0xff]
    %v1351 = vld [vmem:[%s1261 + $0x2c8] sm:$0xff]
    %v1352 = vld [vmem:[%s1261 + $0x2d0] sm:$0xff]
    %v1353 = vld [vmem:[%s1261 + $0x2d8] sm:$0xff]
    %v1354 = vld [vmem:[%s1261 + $0x2e0] sm:$0xff]
    %v1355 = vld [vmem:[%s1261 + $0x2e8] sm:$0xff]
    %v1356 = vld [vmem:[%s1261 + $0x2f0] sm:$0xff]
    %v1357 = vld [vmem:[%s1261 + $0x2f8] sm:$0xff]
    %v1358 = vld [vmem:[%s1261 + $0x300] sm:$0xff]
    %v1359 = vld [vmem:[%s1261 + $0x308] sm:$0xff]
    %v1360 = vld [vmem:[%s1261 + $0x310] sm:$0xff]
    %v1361 = vld [vmem:[%s1261 + $0x318] sm:$0xff]
    %v1362 = vld [vmem:[%s1261 + $0x320] sm:$0xff]
    %v1363 = vld [vmem:[%s1261 + $0x328] sm:$0xff]
    %v1364 = vld [vmem:[%s1261 + $0x330] sm:$0xff]
    %v1365 = vld [vmem:[%s1261 + $0x338] sm:$0xff]
    %v1366 = vld [vmem:[%s1261 + $0x340] sm:$0xff]
    %v1367 = vld [vmem:[%s1261 + $0x348] sm:$0xff]
    %v1368 = vld [vmem:[%s1261 + $0x350] sm:$0xff]
    %v1369 = vld [vmem:[%s1261 + $0x358] sm:$0xff]
    %v1370 = vld [vmem:[%s1261 + $0x360] sm:$0xff]
    %v1371 = vld [vmem:[%s1261 + $0x368] sm:$0xff]
    %v1372 = vld [vmem:[%s1261 + $0x370] sm:$0xff]
    %v1373 = vld [vmem:[%s1261 + $0x378] sm:$0xff]
    %v1374 = vld [vmem:[%s1261 + $0x380] sm:$0xff]
    %v1375 = vld [vmem:[%s1261 + $0x388] sm:$0xff]
    %v1376 = vld [vmem:[%s1261 + $0x390] sm:$0xff]
    %v1377 = vld [vmem:[%s1261 + $0x398] sm:$0xff]
    %v1378 = vld [vmem:[%s1261 + $0x3a0] sm:$0xff]
    %v1379 = vld [vmem:[%s1261 + $0x3a8] sm:$0xff]
    %v1380 = vld [vmem:[%s1261 + $0x3b0] sm:$0xff]
    %v1381 = vld [vmem:[%s1261 + $0x3b8] sm:$0xff]
    %v1382 = vld [vmem:[%s1261 + $0x3c0] sm:$0xff]
    %v1383 = vld [vmem:[%s1261 + $0x3c8] sm:$0xff]
    %v1384 = vld [vmem:[%s1261 + $0x3d0] sm:$0xff]
    %v1385 = vld [vmem:[%s1261 + $0x3d8] sm:$0xff]
    %v1386 = vld [vmem:[%s1261 + $0x3e0] sm:$0xff]
    %v1387 = vld [vmem:[%s1261 + $0x3e8] sm:$0xff]
    %v1388 = vld [vmem:[%s1261 + $0x3f0] sm:$0xff]
    %v1389 = vld [vmem:[%s1261 + $0x3f8] sm:$0xff]
    %1390 = vmatpush.msra.mxu0 %v1382
    %1391 = vmatpush.msra.mxu0 %v1374
    %1392 = vmatpush.msra.mxu0 %v1366
    %1393 = vmatpush.msra.mxu0 %v1358
    %1394 = vmatpush.msra.mxu0 %v1350
    %1395 = vmatpush.msra.mxu0 %v1342
    %1396 = vmatpush.msra.mxu0 %v1334
    %1397 = vmatpush.msra.mxu0 %v1326
    %1398 = vmatpush.msra.mxu0 %v1318
    %1399 = vmatpush.msra.mxu0 %v1310
    %1400 = vmatpush.msra.mxu0 %v1302
    %1401 = vmatpush.msra.mxu0 %v1294
    %1402 = vmatpush.msra.mxu0 %v1286
    %1403 = vmatpush.msra.mxu0 %v1278
    %1404 = vmatpush.msra.mxu0 %v1270
    %1405 = vmatpush.msra.mxu0 %v1262
    %1406 = vmatmul.f32.gmra.mxu0 %v1259
    %v1407 = vpop.f32.mrf.mxu0
    %v1408 = vadd.f32 0.0, %v1407
    %1409 = vdwg.mxu0
    %1410 = vmatpush.msra.mxu0 %v1383
    %1411 = vmatpush.msra.mxu0 %v1375
    %1412 = vmatpush.msra.mxu0 %v1367
    %1413 = vmatpush.msra.mxu0 %v1359
    %1414 = vmatpush.msra.mxu0 %v1351
    %1415 = vmatpush.msra.mxu0 %v1343
    %1416 = vmatpush.msra.mxu0 %v1335
    %1417 = vmatpush.msra.mxu0 %v1327
    %1418 = vmatpush.msra.mxu0 %v1319
    %1419 = vmatpush.msra.mxu0 %v1311
    %1420 = vmatpush.msra.mxu0 %v1303
    %1421 = vmatpush.msra.mxu0 %v1295
    %1422 = vmatpush.msra.mxu0 %v1287
    %1423 = vmatpush.msra.mxu0 %v1279
    %1424 = vmatpush.msra.mxu0 %v1271
    %1425 = vmatpush.msra.mxu0 %v1263
    %1426 = vmatmul.f32.gmra.mxu0 %v1259
    %v1427 = vpop.f32.mrf.mxu0
    %v1428 = vadd.f32 0.0, %v1427
    %1429 = vdwg.mxu0
    %1430 = vmatpush.msra.mxu0 %v1384
    %1431 = vmatpush.msra.mxu0 %v1376
    %1432 = vmatpush.msra.mxu0 %v1368
    %1433 = vmatpush.msra.mxu0 %v1360
    %1434 = vmatpush.msra.mxu0 %v1352
    %1435 = vmatpush.msra.mxu0 %v1344
    %1436 = vmatpush.msra.mxu0 %v1336
    %1437 = vmatpush.msra.mxu0 %v1328
    %1438 = vmatpush.msra.mxu0 %v1320
    %1439 = vmatpush.msra.mxu0 %v1312
    %1440 = vmatpush.msra.mxu0 %v1304
    %1441 = vmatpush.msra.mxu0 %v1296
    %1442 = vmatpush.msra.mxu0 %v1288
    %1443 = vmatpush.msra.mxu0 %v1280
    %1444 = vmatpush.msra.mxu0 %v1272
    %1445 = vmatpush.msra.mxu0 %v1264
    %1446 = vmatmul.f32.gmra.mxu0 %v1259
    %v1447 = vpop.f32.mrf.mxu0
    %v1448 = vadd.f32 0.0, %v1447
    %1449 = vdwg.mxu0
    %1450 = vmatpush.msra.mxu0 %v1385
    %1451 = vmatpush.msra.mxu0 %v1377
    %1452 = vmatpush.msra.mxu0 %v1369
    %1453 = vmatpush.msra.mxu0 %v1361
    %1454 = vmatpush.msra.mxu0 %v1353
    %1455 = vmatpush.msra.mxu0 %v1345
    %1456 = vmatpush.msra.mxu0 %v1337
    %1457 = vmatpush.msra.mxu0 %v1329
    %1458 = vmatpush.msra.mxu0 %v1321
    %1459 = vmatpush.msra.mxu0 %v1313
    %1460 = vmatpush.msra.mxu0 %v1305
    %1461 = vmatpush.msra.mxu0 %v1297
    %1462 = vmatpush.msra.mxu0 %v1289
    %1463 = vmatpush.msra.mxu0 %v1281
    %1464 = vmatpush.msra.mxu0 %v1273
    %1465 = vmatpush.msra.mxu0 %v1265
    %1466 = vmatmul.f32.gmra.mxu0 %v1259
    %v1467 = vpop.f32.mrf.mxu0
    %v1468 = vadd.f32 0.0, %v1467
    %1469 = vdwg.mxu0
    %1470 = vmatpush.msra.mxu0 %v1386
    %1471 = vmatpush.msra.mxu0 %v1378
    %1472 = vmatpush.msra.mxu0 %v1370
    %1473 = vmatpush.msra.mxu0 %v1362
    %1474 = vmatpush.msra.mxu0 %v1354
    %1475 = vmatpush.msra.mxu0 %v1346
    %1476 = vmatpush.msra.mxu0 %v1338
    %1477 = vmatpush.msra.mxu0 %v1330
    %1478 = vmatpush.msra.mxu0 %v1322
    %1479 = vmatpush.msra.mxu0 %v1314
    %1480 = vmatpush.msra.mxu0 %v1306
    %1481 = vmatpush.msra.mxu0 %v1298
    %1482 = vmatpush.msra.mxu0 %v1290
    %1483 = vmatpush.msra.mxu0 %v1282
    %1484 = vmatpush.msra.mxu0 %v1274
    %1485 = vmatpush.msra.mxu0 %v1266
    %1486 = vmatmul.f32.gmra.mxu0 %v1259
    %v1487 = vpop.f32.mrf.mxu0
    %v1488 = vadd.f32 0.0, %v1487
    %1489 = vdwg.mxu0
    %1490 = vmatpush.msra.mxu0 %v1387
    %1491 = vmatpush.msra.mxu0 %v1379
    %1492 = vmatpush.msra.mxu0 %v1371
    %1493 = vmatpush.msra.mxu0 %v1363
    %1494 = vmatpush.msra.mxu0 %v1355
    %1495 = vmatpush.msra.mxu0 %v1347
    %1496 = vmatpush.msra.mxu0 %v1339
    %1497 = vmatpush.msra.mxu0 %v1331
    %1498 = vmatpush.msra.mxu0 %v1323
    %1499 = vmatpush.msra.mxu0 %v1315
    %1500 = vmatpush.msra.mxu0 %v1307
    %1501 = vmatpush.msra.mxu0 %v1299
    %1502 = vmatpush.msra.mxu0 %v1291
    %1503 = vmatpush.msra.mxu0 %v1283
    %1504 = vmatpush.msra.mxu0 %v1275
    %1505 = vmatpush.msra.mxu0 %v1267
    %1506 = vmatmul.f32.gmra.mxu0 %v1259
    %v1507 = vpop.f32.mrf.mxu0
    %v1508 = vadd.f32 0.0, %v1507
    %1509 = vdwg.mxu0
    %1510 = vmatpush.msra.mxu0 %v1388
    %1511 = vmatpush.msra.mxu0 %v1380
    %1512 = vmatpush.msra.mxu0 %v1372
    %1513 = vmatpush.msra.mxu0 %v1364
    %1514 = vmatpush.msra.mxu0 %v1356
    %1515 = vmatpush.msra.mxu0 %v1348
    %1516 = vmatpush.msra.mxu0 %v1340
    %1517 = vmatpush.msra.mxu0 %v1332
    %1518 = vmatpush.msra.mxu0 %v1324
    %1519 = vmatpush.msra.mxu0 %v1316
    %1520 = vmatpush.msra.mxu0 %v1308
    %1521 = vmatpush.msra.mxu0 %v1300
    %1522 = vmatpush.msra.mxu0 %v1292
    %1523 = vmatpush.msra.mxu0 %v1284
    %1524 = vmatpush.msra.mxu0 %v1276
    %1525 = vmatpush.msra.mxu0 %v1268
    %1526 = vmatmul.f32.gmra.mxu0 %v1259
    %v1527 = vpop.f32.mrf.mxu0
    %v1528 = vadd.f32 0.0, %v1527
    %1529 = vdwg.mxu0
    %1530 = vmatpush.msra.mxu0 %v1389
    %1531 = vmatpush.msra.mxu0 %v1381
    %1532 = vmatpush.msra.mxu0 %v1373
    %1533 = vmatpush.msra.mxu0 %v1365
    %1534 = vmatpush.msra.mxu0 %v1357
    %1535 = vmatpush.msra.mxu0 %v1349
    %1536 = vmatpush.msra.mxu0 %v1341
    %1537 = vmatpush.msra.mxu0 %v1333
    %1538 = vmatpush.msra.mxu0 %v1325
    %1539 = vmatpush.msra.mxu0 %v1317
    %1540 = vmatpush.msra.mxu0 %v1309
    %1541 = vmatpush.msra.mxu0 %v1301
    %1542 = vmatpush.msra.mxu0 %v1293
    %1543 = vmatpush.msra.mxu0 %v1285
    %1544 = vmatpush.msra.mxu0 %v1277
    %1545 = vmatpush.msra.mxu0 %v1269
    %1546 = vmatmul.f32.gmra.mxu0 %v1259
    %v1547 = vpop.f32.mrf.mxu0
    %v1548 = vadd.f32 0.0, %v1547
    %1549 = vdwg.mxu0
    %v1550 = vadd.f32 %v1094, %v1408
    %v1551 = vadd.f32 %v1114, %v1428
    %v1552 = vadd.f32 %v1134, %v1448
    %v1553 = vadd.f32 %v1154, %v1468
    %v1554 = vadd.f32 %v1174, %v1488
    %v1555 = vadd.f32 %v1194, %v1508
    %v1556 = vadd.f32 %v1214, %v1528
    %v1557 = vadd.f32 %v1234, %v1548
    %s1558 = scalar_lea.vmem [#allocation19], 6
    %v1559 = vld [vmem:[%s1558] sm:$0x3]
    %v1561 = vsel %vm610, %v1559, 0
    %1563 = vmatpush.msra.mxu0 0.0
    %1564 = vmatpush.msra.mxu0 0.0
    %1565 = vmatpush.msra.mxu0 0.0
    %1566 = vmatpush.msra.mxu0 0.0
    %1567 = vmatpush.msra.mxu0 0.0
    %1568 = vmatpush.msra.mxu0 0.0
    %1569 = vmatpush.msra.mxu0 0.0
    %1570 = vmatpush.msra.mxu0 0.0
    %1571 = vmatpush.msra.mxu0 0.0
    %1572 = vmatpush.msra.mxu0 0.0
    %1573 = vmatpush.msra.mxu0 0.0
    %1574 = vmatpush.msra.mxu0 0.0
    %1575 = vmatpush.msra.mxu0 0.0
    %1576 = vmatpush.msra.mxu0 0.0
    %1577 = vmatpush.msra.mxu0 0.0
    %1578 = vmatpush.msra.mxu0 %v608
    %1579 = vmatmul.f32.gmra.mxu0 %v1561
    %v1580 = vpop.f32.mrf.mxu0
    %v1581 = vadd.f32 0.0, %v1580
    %1582 = vdwg.mxu0
    %s1583 = scalar_lea.vmem [#allocation20], 3072
    %v1584 = vld [vmem:[%s1583] sm:$0xff]
    %v1585 = vld [vmem:[%s1583 + $0x8] sm:$0xff]
    %v1586 = vld [vmem:[%s1583 + $0x10] sm:$0xff]
    %v1587 = vld [vmem:[%s1583 + $0x18] sm:$0xff]
    %v1588 = vld [vmem:[%s1583 + $0x20] sm:$0xff]
    %v1589 = vld [vmem:[%s1583 + $0x28] sm:$0xff]
    %v1590 = vld [vmem:[%s1583 + $0x30] sm:$0xff]
    %v1591 = vld [vmem:[%s1583 + $0x38] sm:$0xff]
    %v1592 = vld [vmem:[%s1583 + $0x40] sm:$0xff]
    %v1593 = vld [vmem:[%s1583 + $0x48] sm:$0xff]
    %v1594 = vld [vmem:[%s1583 + $0x50] sm:$0xff]
    %v1595 = vld [vmem:[%s1583 + $0x58] sm:$0xff]
    %v1596 = vld [vmem:[%s1583 + $0x60] sm:$0xff]
    %v1597 = vld [vmem:[%s1583 + $0x68] sm:$0xff]
    %v1598 = vld [vmem:[%s1583 + $0x70] sm:$0xff]
    %v1599 = vld [vmem:[%s1583 + $0x78] sm:$0xff]
    %v1600 = vld [vmem:[%s1583 + $0x80] sm:$0xff]
    %v1601 = vld [vmem:[%s1583 + $0x88] sm:$0xff]
    %v1602 = vld [vmem:[%s1583 + $0x90] sm:$0xff]
    %v1603 = vld [vmem:[%s1583 + $0x98] sm:$0xff]
    %v1604 = vld [vmem:[%s1583 + $0xa0] sm:$0xff]
    %v1605 = vld [vmem:[%s1583 + $0xa8] sm:$0xff]
    %v1606 = vld [vmem:[%s1583 + $0xb0] sm:$0xff]
    %v1607 = vld [vmem:[%s1583 + $0xb8] sm:$0xff]
    %v1608 = vld [vmem:[%s1583 + $0xc0] sm:$0xff]
    %v1609 = vld [vmem:[%s1583 + $0xc8] sm:$0xff]
    %v1610 = vld [vmem:[%s1583 + $0xd0] sm:$0xff]
    %v1611 = vld [vmem:[%s1583 + $0xd8] sm:$0xff]
    %v1612 = vld [vmem:[%s1583 + $0xe0] sm:$0xff]
    %v1613 = vld [vmem:[%s1583 + $0xe8] sm:$0xff]
    %v1614 = vld [vmem:[%s1583 + $0xf0] sm:$0xff]
    %v1615 = vld [vmem:[%s1583 + $0xf8] sm:$0xff]
    %v1616 = vld [vmem:[%s1583 + $0x100] sm:$0xff]
    %v1617 = vld [vmem:[%s1583 + $0x108] sm:$0xff]
    %v1618 = vld [vmem:[%s1583 + $0x110] sm:$0xff]
    %v1619 = vld [vmem:[%s1583 + $0x118] sm:$0xff]
    %v1620 = vld [vmem:[%s1583 + $0x120] sm:$0xff]
    %v1621 = vld [vmem:[%s1583 + $0x128] sm:$0xff]
    %v1622 = vld [vmem:[%s1583 + $0x130] sm:$0xff]
    %v1623 = vld [vmem:[%s1583 + $0x138] sm:$0xff]
    %v1624 = vld [vmem:[%s1583 + $0x140] sm:$0xff]
    %v1625 = vld [vmem:[%s1583 + $0x148] sm:$0xff]
    %v1626 = vld [vmem:[%s1583 + $0x150] sm:$0xff]
    %v1627 = vld [vmem:[%s1583 + $0x158] sm:$0xff]
    %v1628 = vld [vmem:[%s1583 + $0x160] sm:$0xff]
    %v1629 = vld [vmem:[%s1583 + $0x168] sm:$0xff]
    %v1630 = vld [vmem:[%s1583 + $0x170] sm:$0xff]
    %v1631 = vld [vmem:[%s1583 + $0x178] sm:$0xff]
    %v1632 = vld [vmem:[%s1583 + $0x180] sm:$0xff]
    %v1633 = vld [vmem:[%s1583 + $0x188] sm:$0xff]
    %v1634 = vld [vmem:[%s1583 + $0x190] sm:$0xff]
    %v1635 = vld [vmem:[%s1583 + $0x198] sm:$0xff]
    %v1636 = vld [vmem:[%s1583 + $0x1a0] sm:$0xff]
    %v1637 = vld [vmem:[%s1583 + $0x1a8] sm:$0xff]
    %v1638 = vld [vmem:[%s1583 + $0x1b0] sm:$0xff]
    %v1639 = vld [vmem:[%s1583 + $0x1b8] sm:$0xff]
    %v1640 = vld [vmem:[%s1583 + $0x1c0] sm:$0xff]
    %v1641 = vld [vmem:[%s1583 + $0x1c8] sm:$0xff]
    %v1642 = vld [vmem:[%s1583 + $0x1d0] sm:$0xff]
    %v1643 = vld [vmem:[%s1583 + $0x1d8] sm:$0xff]
    %v1644 = vld [vmem:[%s1583 + $0x1e0] sm:$0xff]
    %v1645 = vld [vmem:[%s1583 + $0x1e8] sm:$0xff]
    %v1646 = vld [vmem:[%s1583 + $0x1f0] sm:$0xff]
    %v1647 = vld [vmem:[%s1583 + $0x1f8] sm:$0xff]
    %v1648 = vld [vmem:[%s1583 + $0x200] sm:$0xff]
    %v1649 = vld [vmem:[%s1583 + $0x208] sm:$0xff]
    %v1650 = vld [vmem:[%s1583 + $0x210] sm:$0xff]
    %v1651 = vld [vmem:[%s1583 + $0x218] sm:$0xff]
    %v1652 = vld [vmem:[%s1583 + $0x220] sm:$0xff]
    %v1653 = vld [vmem:[%s1583 + $0x228] sm:$0xff]
    %v1654 = vld [vmem:[%s1583 + $0x230] sm:$0xff]
    %v1655 = vld [vmem:[%s1583 + $0x238] sm:$0xff]
    %v1656 = vld [vmem:[%s1583 + $0x240] sm:$0xff]
    %v1657 = vld [vmem:[%s1583 + $0x248] sm:$0xff]
    %v1658 = vld [vmem:[%s1583 + $0x250] sm:$0xff]
    %v1659 = vld [vmem:[%s1583 + $0x258] sm:$0xff]
    %v1660 = vld [vmem:[%s1583 + $0x260] sm:$0xff]
    %v1661 = vld [vmem:[%s1583 + $0x268] sm:$0xff]
    %v1662 = vld [vmem:[%s1583 + $0x270] sm:$0xff]
    %v1663 = vld [vmem:[%s1583 + $0x278] sm:$0xff]
    %v1664 = vld [vmem:[%s1583 + $0x280] sm:$0xff]
    %v1665 = vld [vmem:[%s1583 + $0x288] sm:$0xff]
    %v1666 = vld [vmem:[%s1583 + $0x290] sm:$0xff]
    %v1667 = vld [vmem:[%s1583 + $0x298] sm:$0xff]
    %v1668 = vld [vmem:[%s1583 + $0x2a0] sm:$0xff]
    %v1669 = vld [vmem:[%s1583 + $0x2a8] sm:$0xff]
    %v1670 = vld [vmem:[%s1583 + $0x2b0] sm:$0xff]
    %v1671 = vld [vmem:[%s1583 + $0x2b8] sm:$0xff]
    %v1672 = vld [vmem:[%s1583 + $0x2c0] sm:$0xff]
    %v1673 = vld [vmem:[%s1583 + $0x2c8] sm:$0xff]
    %v1674 = vld [vmem:[%s1583 + $0x2d0] sm:$0xff]
    %v1675 = vld [vmem:[%s1583 + $0x2d8] sm:$0xff]
    %v1676 = vld [vmem:[%s1583 + $0x2e0] sm:$0xff]
    %v1677 = vld [vmem:[%s1583 + $0x2e8] sm:$0xff]
    %v1678 = vld [vmem:[%s1583 + $0x2f0] sm:$0xff]
    %v1679 = vld [vmem:[%s1583 + $0x2f8] sm:$0xff]
    %v1680 = vld [vmem:[%s1583 + $0x300] sm:$0xff]
    %v1681 = vld [vmem:[%s1583 + $0x308] sm:$0xff]
    %v1682 = vld [vmem:[%s1583 + $0x310] sm:$0xff]
    %v1683 = vld [vmem:[%s1583 + $0x318] sm:$0xff]
    %v1684 = vld [vmem:[%s1583 + $0x320] sm:$0xff]
    %v1685 = vld [vmem:[%s1583 + $0x328] sm:$0xff]
    %v1686 = vld [vmem:[%s1583 + $0x330] sm:$0xff]
    %v1687 = vld [vmem:[%s1583 + $0x338] sm:$0xff]
    %v1688 = vld [vmem:[%s1583 + $0x340] sm:$0xff]
    %v1689 = vld [vmem:[%s1583 + $0x348] sm:$0xff]
    %v1690 = vld [vmem:[%s1583 + $0x350] sm:$0xff]
    %v1691 = vld [vmem:[%s1583 + $0x358] sm:$0xff]
    %v1692 = vld [vmem:[%s1583 + $0x360] sm:$0xff]
    %v1693 = vld [vmem:[%s1583 + $0x368] sm:$0xff]
    %v1694 = vld [vmem:[%s1583 + $0x370] sm:$0xff]
    %v1695 = vld [vmem:[%s1583 + $0x378] sm:$0xff]
    %v1696 = vld [vmem:[%s1583 + $0x380] sm:$0xff]
    %v1697 = vld [vmem:[%s1583 + $0x388] sm:$0xff]
    %v1698 = vld [vmem:[%s1583 + $0x390] sm:$0xff]
    %v1699 = vld [vmem:[%s1583 + $0x398] sm:$0xff]
    %v1700 = vld [vmem:[%s1583 + $0x3a0] sm:$0xff]
    %v1701 = vld [vmem:[%s1583 + $0x3a8] sm:$0xff]
    %v1702 = vld [vmem:[%s1583 + $0x3b0] sm:$0xff]
    %v1703 = vld [vmem:[%s1583 + $0x3b8] sm:$0xff]
    %v1704 = vld [vmem:[%s1583 + $0x3c0] sm:$0xff]
    %v1705 = vld [vmem:[%s1583 + $0x3c8] sm:$0xff]
    %v1706 = vld [vmem:[%s1583 + $0x3d0] sm:$0xff]
    %v1707 = vld [vmem:[%s1583 + $0x3d8] sm:$0xff]
    %v1708 = vld [vmem:[%s1583 + $0x3e0] sm:$0xff]
    %v1709 = vld [vmem:[%s1583 + $0x3e8] sm:$0xff]
    %v1710 = vld [vmem:[%s1583 + $0x3f0] sm:$0xff]
    %v1711 = vld [vmem:[%s1583 + $0x3f8] sm:$0xff]
    %1712 = vmatpush.msra.mxu0 %v1704
    %1713 = vmatpush.msra.mxu0 %v1696
    %1714 = vmatpush.msra.mxu0 %v1688
    %1715 = vmatpush.msra.mxu0 %v1680
    %1716 = vmatpush.msra.mxu0 %v1672
    %1717 = vmatpush.msra.mxu0 %v1664
    %1718 = vmatpush.msra.mxu0 %v1656
    %1719 = vmatpush.msra.mxu0 %v1648
    %1720 = vmatpush.msra.mxu0 %v1640
    %1721 = vmatpush.msra.mxu0 %v1632
    %1722 = vmatpush.msra.mxu0 %v1624
    %1723 = vmatpush.msra.mxu0 %v1616
    %1724 = vmatpush.msra.mxu0 %v1608
    %1725 = vmatpush.msra.mxu0 %v1600
    %1726 = vmatpush.msra.mxu0 %v1592
    %1727 = vmatpush.msra.mxu0 %v1584
    %1728 = vmatmul.f32.gmra.mxu0 %v1581
    %v1729 = vpop.f32.mrf.mxu0
    %v1730 = vadd.f32 0.0, %v1729
    %1731 = vdwg.mxu0
    %1732 = vmatpush.msra.mxu0 %v1705
    %1733 = vmatpush.msra.mxu0 %v1697
    %1734 = vmatpush.msra.mxu0 %v1689
    %1735 = vmatpush.msra.mxu0 %v1681
    %1736 = vmatpush.msra.mxu0 %v1673
    %1737 = vmatpush.msra.mxu0 %v1665
    %1738 = vmatpush.msra.mxu0 %v1657
    %1739 = vmatpush.msra.mxu0 %v1649
    %1740 = vmatpush.msra.mxu0 %v1641
    %1741 = vmatpush.msra.mxu0 %v1633
    %1742 = vmatpush.msra.mxu0 %v1625
    %1743 = vmatpush.msra.mxu0 %v1617
    %1744 = vmatpush.msra.mxu0 %v1609
    %1745 = vmatpush.msra.mxu0 %v1601
    %1746 = vmatpush.msra.mxu0 %v1593
    %1747 = vmatpush.msra.mxu0 %v1585
    %1748 = vmatmul.f32.gmra.mxu0 %v1581
    %v1749 = vpop.f32.mrf.mxu0
    %v1750 = vadd.f32 0.0, %v1749
    %1751 = vdwg.mxu0
    %1752 = vmatpush.msra.mxu0 %v1706
    %1753 = vmatpush.msra.mxu0 %v1698
    %1754 = vmatpush.msra.mxu0 %v1690
    %1755 = vmatpush.msra.mxu0 %v1682
    %1756 = vmatpush.msra.mxu0 %v1674
    %1757 = vmatpush.msra.mxu0 %v1666
    %1758 = vmatpush.msra.mxu0 %v1658
    %1759 = vmatpush.msra.mxu0 %v1650
    %1760 = vmatpush.msra.mxu0 %v1642
    %1761 = vmatpush.msra.mxu0 %v1634
    %1762 = vmatpush.msra.mxu0 %v1626
    %1763 = vmatpush.msra.mxu0 %v1618
    %1764 = vmatpush.msra.mxu0 %v1610
    %1765 = vmatpush.msra.mxu0 %v1602
    %1766 = vmatpush.msra.mxu0 %v1594
    %1767 = vmatpush.msra.mxu0 %v1586
    %1768 = vmatmul.f32.gmra.mxu0 %v1581
    %v1769 = vpop.f32.mrf.mxu0
    %v1770 = vadd.f32 0.0, %v1769
    %1771 = vdwg.mxu0
    %1772 = vmatpush.msra.mxu0 %v1707
    %1773 = vmatpush.msra.mxu0 %v1699
    %1774 = vmatpush.msra.mxu0 %v1691
    %1775 = vmatpush.msra.mxu0 %v1683
    %1776 = vmatpush.msra.mxu0 %v1675
    %1777 = vmatpush.msra.mxu0 %v1667
    %1778 = vmatpush.msra.mxu0 %v1659
    %1779 = vmatpush.msra.mxu0 %v1651
    %1780 = vmatpush.msra.mxu0 %v1643
    %1781 = vmatpush.msra.mxu0 %v1635
    %1782 = vmatpush.msra.mxu0 %v1627
    %1783 = vmatpush.msra.mxu0 %v1619
    %1784 = vmatpush.msra.mxu0 %v1611
    %1785 = vmatpush.msra.mxu0 %v1603
    %1786 = vmatpush.msra.mxu0 %v1595
    %1787 = vmatpush.msra.mxu0 %v1587
    %1788 = vmatmul.f32.gmra.mxu0 %v1581
    %v1789 = vpop.f32.mrf.mxu0
    %v1790 = vadd.f32 0.0, %v1789
    %1791 = vdwg.mxu0
    %1792 = vmatpush.msra.mxu0 %v1708
    %1793 = vmatpush.msra.mxu0 %v1700
    %1794 = vmatpush.msra.mxu0 %v1692
    %1795 = vmatpush.msra.mxu0 %v1684
    %1796 = vmatpush.msra.mxu0 %v1676
    %1797 = vmatpush.msra.mxu0 %v1668
    %1798 = vmatpush.msra.mxu0 %v1660
    %1799 = vmatpush.msra.mxu0 %v1652
    %1800 = vmatpush.msra.mxu0 %v1644
    %1801 = vmatpush.msra.mxu0 %v1636
    %1802 = vmatpush.msra.mxu0 %v1628
    %1803 = vmatpush.msra.mxu0 %v1620
    %1804 = vmatpush.msra.mxu0 %v1612
    %1805 = vmatpush.msra.mxu0 %v1604
    %1806 = vmatpush.msra.mxu0 %v1596
    %1807 = vmatpush.msra.mxu0 %v1588
    %1808 = vmatmul.f32.gmra.mxu0 %v1581
    %v1809 = vpop.f32.mrf.mxu0
    %v1810 = vadd.f32 0.0, %v1809
    %1811 = vdwg.mxu0
    %1812 = vmatpush.msra.mxu0 %v1709
    %1813 = vmatpush.msra.mxu0 %v1701
    %1814 = vmatpush.msra.mxu0 %v1693
    %1815 = vmatpush.msra.mxu0 %v1685
    %1816 = vmatpush.msra.mxu0 %v1677
    %1817 = vmatpush.msra.mxu0 %v1669
    %1818 = vmatpush.msra.mxu0 %v1661
    %1819 = vmatpush.msra.mxu0 %v1653
    %1820 = vmatpush.msra.mxu0 %v1645
    %1821 = vmatpush.msra.mxu0 %v1637
    %1822 = vmatpush.msra.mxu0 %v1629
    %1823 = vmatpush.msra.mxu0 %v1621
    %1824 = vmatpush.msra.mxu0 %v1613
    %1825 = vmatpush.msra.mxu0 %v1605
    %1826 = vmatpush.msra.mxu0 %v1597
    %1827 = vmatpush.msra.mxu0 %v1589
    %1828 = vmatmul.f32.gmra.mxu0 %v1581
    %v1829 = vpop.f32.mrf.mxu0
    %v1830 = vadd.f32 0.0, %v1829
    %1831 = vdwg.mxu0
    %1832 = vmatpush.msra.mxu0 %v1710
    %1833 = vmatpush.msra.mxu0 %v1702
    %1834 = vmatpush.msra.mxu0 %v1694
    %1835 = vmatpush.msra.mxu0 %v1686
    %1836 = vmatpush.msra.mxu0 %v1678
    %1837 = vmatpush.msra.mxu0 %v1670
    %1838 = vmatpush.msra.mxu0 %v1662
    %1839 = vmatpush.msra.mxu0 %v1654
    %1840 = vmatpush.msra.mxu0 %v1646
    %1841 = vmatpush.msra.mxu0 %v1638
    %1842 = vmatpush.msra.mxu0 %v1630
    %1843 = vmatpush.msra.mxu0 %v1622
    %1844 = vmatpush.msra.mxu0 %v1614
    %1845 = vmatpush.msra.mxu0 %v1606
    %1846 = vmatpush.msra.mxu0 %v1598
    %1847 = vmatpush.msra.mxu0 %v1590
    %1848 = vmatmul.f32.gmra.mxu0 %v1581
    %v1849 = vpop.f32.mrf.mxu0
    %v1850 = vadd.f32 0.0, %v1849
    %1851 = vdwg.mxu0
    %1852 = vmatpush.msra.mxu0 %v1711
    %1853 = vmatpush.msra.mxu0 %v1703
    %1854 = vmatpush.msra.mxu0 %v1695
    %1855 = vmatpush.msra.mxu0 %v1687
    %1856 = vmatpush.msra.mxu0 %v1679
    %1857 = vmatpush.msra.mxu0 %v1671
    %1858 = vmatpush.msra.mxu0 %v1663
    %1859 = vmatpush.msra.mxu0 %v1655
    %1860 = vmatpush.msra.mxu0 %v1647
    %1861 = vmatpush.msra.mxu0 %v1639
    %1862 = vmatpush.msra.mxu0 %v1631
    %1863 = vmatpush.msra.mxu0 %v1623
    %1864 = vmatpush.msra.mxu0 %v1615
    %1865 = vmatpush.msra.mxu0 %v1607
    %1866 = vmatpush.msra.mxu0 %v1599
    %1867 = vmatpush.msra.mxu0 %v1591
    %1868 = vmatmul.f32.gmra.mxu0 %v1581
    %v1869 = vpop.f32.mrf.mxu0
    %v1870 = vadd.f32 0.0, %v1869
    %1871 = vdwg.mxu0
    %v1872 = vadd.f32 %v1550, %v1730
    %v1873 = vadd.f32 %v1551, %v1750
    %v1874 = vadd.f32 %v1552, %v1770
    %v1875 = vadd.f32 %v1553, %v1790
    %v1876 = vadd.f32 %v1554, %v1810
    %v1877 = vadd.f32 %v1555, %v1830
    %v1878 = vadd.f32 %v1556, %v1850
    %v1879 = vadd.f32 %v1557, %v1870
    %v1880 = vld [vmem:[#allocation22] sm:$0xff]
    %v1882 = vperm.slane %v1880, 0
    %v1883 = vperm.slane %v1880, 1
    %v1884 = vperm.slane %v1880, 2
    %v1885 = vperm.slane %v1880, 3
    %v1886 = vperm.slane %v1880, 4
    %v1887 = vperm.slane %v1880, 5
    %v1888 = vperm.slane %v1880, 6
    %v1889 = vperm.slane %v1880, 7
    %v1898 = vadd.f32 %v1872, %v1882
    %v1899 = vadd.f32 %v1873, %v1883
    %v1900 = vadd.f32 %v1874, %v1884
    %v1901 = vadd.f32 %v1875, %v1885
    %v1902 = vadd.f32 %v1876, %v1886
    %v1903 = vadd.f32 %v1877, %v1887
    %v1904 = vadd.f32 %v1878, %v1888
    %v1905 = vadd.f32 %v1879, %v1889
    %v1906 = vmax.f32 %v1898, 0.0
    %v1907 = vmax.f32 %v1899, 0.0
    %v1908 = vmax.f32 %v1900, 0.0
    %v1909 = vmax.f32 %v1901, 0.0
    %v1910 = vmax.f32 %v1902, 0.0
    %v1911 = vmax.f32 %v1903, 0.0
    %v1912 = vmax.f32 %v1904, 0.0
    %v1913 = vmax.f32 %v1905, 0.0
    %v1914 = vld [vmem:[#allocation23] sm:$0xff]
    %v1915 = vld [vmem:[#allocation23 + $0x8] sm:$0xff]
    %v1916 = vld [vmem:[#allocation23 + $0x10] sm:$0xff]
    %v1917 = vld [vmem:[#allocation23 + $0x18] sm:$0xff]
    %v1918 = vld [vmem:[#allocation23 + $0x20] sm:$0xff]
    %v1919 = vld [vmem:[#allocation23 + $0x28] sm:$0xff]
    %v1920 = vld [vmem:[#allocation23 + $0x30] sm:$0xff]
    %v1921 = vld [vmem:[#allocation23 + $0x38] sm:$0xff]
    %v1922 = vld [vmem:[#allocation23 + $0x40] sm:$0xff]
    %v1923 = vld [vmem:[#allocation23 + $0x48] sm:$0xff]
    %v1924 = vld [vmem:[#allocation23 + $0x50] sm:$0xff]
    %v1925 = vld [vmem:[#allocation23 + $0x58] sm:$0xff]
    %v1926 = vld [vmem:[#allocation23 + $0x60] sm:$0xff]
    %v1927 = vld [vmem:[#allocation23 + $0x68] sm:$0xff]
    %v1928 = vld [vmem:[#allocation23 + $0x70] sm:$0xff]
    %v1929 = vld [vmem:[#allocation23 + $0x78] sm:$0xff]
    %v1930 = vld [vmem:[#allocation23 + $0x80] sm:$0xff]
    %v1931 = vld [vmem:[#allocation23 + $0x88] sm:$0xff]
    %v1932 = vld [vmem:[#allocation23 + $0x90] sm:$0xff]
    %v1933 = vld [vmem:[#allocation23 + $0x98] sm:$0xff]
    %v1934 = vld [vmem:[#allocation23 + $0xa0] sm:$0xff]
    %v1935 = vld [vmem:[#allocation23 + $0xa8] sm:$0xff]
    %v1936 = vld [vmem:[#allocation23 + $0xb0] sm:$0xff]
    %v1937 = vld [vmem:[#allocation23 + $0xb8] sm:$0xff]
    %v1938 = vld [vmem:[#allocation23 + $0xc0] sm:$0xff]
    %v1939 = vld [vmem:[#allocation23 + $0xc8] sm:$0xff]
    %v1940 = vld [vmem:[#allocation23 + $0xd0] sm:$0xff]
    %v1941 = vld [vmem:[#allocation23 + $0xd8] sm:$0xff]
    %v1942 = vld [vmem:[#allocation23 + $0xe0] sm:$0xff]
    %v1943 = vld [vmem:[#allocation23 + $0xe8] sm:$0xff]
    %v1944 = vld [vmem:[#allocation23 + $0xf0] sm:$0xff]
    %v1945 = vld [vmem:[#allocation23 + $0xf8] sm:$0xff]
    %v1946 = vld [vmem:[#allocation23 + $0x100] sm:$0xff]
    %v1947 = vld [vmem:[#allocation23 + $0x108] sm:$0xff]
    %v1948 = vld [vmem:[#allocation23 + $0x110] sm:$0xff]
    %v1949 = vld [vmem:[#allocation23 + $0x118] sm:$0xff]
    %v1950 = vld [vmem:[#allocation23 + $0x120] sm:$0xff]
    %v1951 = vld [vmem:[#allocation23 + $0x128] sm:$0xff]
    %v1952 = vld [vmem:[#allocation23 + $0x130] sm:$0xff]
    %v1953 = vld [vmem:[#allocation23 + $0x138] sm:$0xff]
    %v1954 = vld [vmem:[#allocation23 + $0x140] sm:$0xff]
    %v1955 = vld [vmem:[#allocation23 + $0x148] sm:$0xff]
    %v1956 = vld [vmem:[#allocation23 + $0x150] sm:$0xff]
    %v1957 = vld [vmem:[#allocation23 + $0x158] sm:$0xff]
    %v1958 = vld [vmem:[#allocation23 + $0x160] sm:$0xff]
    %v1959 = vld [vmem:[#allocation23 + $0x168] sm:$0xff]
    %v1960 = vld [vmem:[#allocation23 + $0x170] sm:$0xff]
    %v1961 = vld [vmem:[#allocation23 + $0x178] sm:$0xff]
    %v1962 = vld [vmem:[#allocation23 + $0x180] sm:$0xff]
    %v1963 = vld [vmem:[#allocation23 + $0x188] sm:$0xff]
    %v1964 = vld [vmem:[#allocation23 + $0x190] sm:$0xff]
    %v1965 = vld [vmem:[#allocation23 + $0x198] sm:$0xff]
    %v1966 = vld [vmem:[#allocation23 + $0x1a0] sm:$0xff]
    %v1967 = vld [vmem:[#allocation23 + $0x1a8] sm:$0xff]
    %v1968 = vld [vmem:[#allocation23 + $0x1b0] sm:$0xff]
    %v1969 = vld [vmem:[#allocation23 + $0x1b8] sm:$0xff]
    %v1970 = vld [vmem:[#allocation23 + $0x1c0] sm:$0xff]
    %v1971 = vld [vmem:[#allocation23 + $0x1c8] sm:$0xff]
    %v1972 = vld [vmem:[#allocation23 + $0x1d0] sm:$0xff]
    %v1973 = vld [vmem:[#allocation23 + $0x1d8] sm:$0xff]
    %v1974 = vld [vmem:[#allocation23 + $0x1e0] sm:$0xff]
    %v1975 = vld [vmem:[#allocation23 + $0x1e8] sm:$0xff]
    %v1976 = vld [vmem:[#allocation23 + $0x1f0] sm:$0xff]
    %v1977 = vld [vmem:[#allocation23 + $0x1f8] sm:$0xff]
    %v1978 = vld [vmem:[#allocation23 + $0x200] sm:$0xff]
    %v1979 = vld [vmem:[#allocation23 + $0x208] sm:$0xff]
    %v1980 = vld [vmem:[#allocation23 + $0x210] sm:$0xff]
    %v1981 = vld [vmem:[#allocation23 + $0x218] sm:$0xff]
    %v1982 = vld [vmem:[#allocation23 + $0x220] sm:$0xff]
    %v1983 = vld [vmem:[#allocation23 + $0x228] sm:$0xff]
    %v1984 = vld [vmem:[#allocation23 + $0x230] sm:$0xff]
    %v1985 = vld [vmem:[#allocation23 + $0x238] sm:$0xff]
    %v1986 = vld [vmem:[#allocation23 + $0x240] sm:$0xff]
    %v1987 = vld [vmem:[#allocation23 + $0x248] sm:$0xff]
    %v1988 = vld [vmem:[#allocation23 + $0x250] sm:$0xff]
    %v1989 = vld [vmem:[#allocation23 + $0x258] sm:$0xff]
    %v1990 = vld [vmem:[#allocation23 + $0x260] sm:$0xff]
    %v1991 = vld [vmem:[#allocation23 + $0x268] sm:$0xff]
    %v1992 = vld [vmem:[#allocation23 + $0x270] sm:$0xff]
    %v1993 = vld [vmem:[#allocation23 + $0x278] sm:$0xff]
    %v1994 = vld [vmem:[#allocation23 + $0x280] sm:$0xff]
    %v1995 = vld [vmem:[#allocation23 + $0x288] sm:$0xff]
    %v1996 = vld [vmem:[#allocation23 + $0x290] sm:$0xff]
    %v1997 = vld [vmem:[#allocation23 + $0x298] sm:$0xff]
    %v1998 = vld [vmem:[#allocation23 + $0x2a0] sm:$0xff]
    %v1999 = vld [vmem:[#allocation23 + $0x2a8] sm:$0xff]
    %v2000 = vld [vmem:[#allocation23 + $0x2b0] sm:$0xff]
    %v2001 = vld [vmem:[#allocation23 + $0x2b8] sm:$0xff]
    %v2002 = vld [vmem:[#allocation23 + $0x2c0] sm:$0xff]
    %v2003 = vld [vmem:[#allocation23 + $0x2c8] sm:$0xff]
    %v2004 = vld [vmem:[#allocation23 + $0x2d0] sm:$0xff]
    %v2005 = vld [vmem:[#allocation23 + $0x2d8] sm:$0xff]
    %v2006 = vld [vmem:[#allocation23 + $0x2e0] sm:$0xff]
    %v2007 = vld [vmem:[#allocation23 + $0x2e8] sm:$0xff]
    %v2008 = vld [vmem:[#allocation23 + $0x2f0] sm:$0xff]
    %v2009 = vld [vmem:[#allocation23 + $0x2f8] sm:$0xff]
    %v2010 = vld [vmem:[#allocation23 + $0x300] sm:$0xff]
    %v2011 = vld [vmem:[#allocation23 + $0x308] sm:$0xff]
    %v2012 = vld [vmem:[#allocation23 + $0x310] sm:$0xff]
    %v2013 = vld [vmem:[#allocation23 + $0x318] sm:$0xff]
    %v2014 = vld [vmem:[#allocation23 + $0x320] sm:$0xff]
    %v2015 = vld [vmem:[#allocation23 + $0x328] sm:$0xff]
    %v2016 = vld [vmem:[#allocation23 + $0x330] sm:$0xff]
    %v2017 = vld [vmem:[#allocation23 + $0x338] sm:$0xff]
    %v2018 = vld [vmem:[#allocation23 + $0x340] sm:$0xff]
    %v2019 = vld [vmem:[#allocation23 + $0x348] sm:$0xff]
    %v2020 = vld [vmem:[#allocation23 + $0x350] sm:$0xff]
    %v2021 = vld [vmem:[#allocation23 + $0x358] sm:$0xff]
    %v2022 = vld [vmem:[#allocation23 + $0x360] sm:$0xff]
    %v2023 = vld [vmem:[#allocation23 + $0x368] sm:$0xff]
    %v2024 = vld [vmem:[#allocation23 + $0x370] sm:$0xff]
    %v2025 = vld [vmem:[#allocation23 + $0x378] sm:$0xff]
    %v2026 = vld [vmem:[#allocation23 + $0x380] sm:$0xff]
    %v2027 = vld [vmem:[#allocation23 + $0x388] sm:$0xff]
    %v2028 = vld [vmem:[#allocation23 + $0x390] sm:$0xff]
    %v2029 = vld [vmem:[#allocation23 + $0x398] sm:$0xff]
    %v2030 = vld [vmem:[#allocation23 + $0x3a0] sm:$0xff]
    %v2031 = vld [vmem:[#allocation23 + $0x3a8] sm:$0xff]
    %v2032 = vld [vmem:[#allocation23 + $0x3b0] sm:$0xff]
    %v2033 = vld [vmem:[#allocation23 + $0x3b8] sm:$0xff]
    %v2034 = vld [vmem:[#allocation23 + $0x3c0] sm:$0xff]
    %v2035 = vld [vmem:[#allocation23 + $0x3c8] sm:$0xff]
    %v2036 = vld [vmem:[#allocation23 + $0x3d0] sm:$0xff]
    %v2037 = vld [vmem:[#allocation23 + $0x3d8] sm:$0xff]
    %v2038 = vld [vmem:[#allocation23 + $0x3e0] sm:$0xff]
    %v2039 = vld [vmem:[#allocation23 + $0x3e8] sm:$0xff]
    %v2040 = vld [vmem:[#allocation23 + $0x3f0] sm:$0xff]
    %v2041 = vld [vmem:[#allocation23 + $0x3f8] sm:$0xff]
    %v2042 = vld [vmem:[#allocation25] sm:$0x1]
    %v2044 = vperm.slane %v2042, 0
    %2046 = vmatpush.msra.mxu0 %v1929
    %2047 = vmatpush.msra.mxu0 %v1928
    %2048 = vmatpush.msra.mxu0 %v1927
    %2049 = vmatpush.msra.mxu0 %v1926
    %2050 = vmatpush.msra.mxu0 %v1925
    %2051 = vmatpush.msra.mxu0 %v1924
    %2052 = vmatpush.msra.mxu0 %v1923
    %2053 = vmatpush.msra.mxu0 %v1922
    %2054 = vmatpush.msra.mxu0 %v1921
    %2055 = vmatpush.msra.mxu0 %v1920
    %2056 = vmatpush.msra.mxu0 %v1919
    %2057 = vmatpush.msra.mxu0 %v1918
    %2058 = vmatpush.msra.mxu0 %v1917
    %2059 = vmatpush.msra.mxu0 %v1916
    %2060 = vmatpush.msra.mxu0 %v1915
    %2061 = vmatpush.msra.mxu0 %v1914
    %2062 = vmatmul.f32.gmra.mxu0 %v1906
    %v2063 = vpop.f32.mrf.mxu0
    %v2064 = vadd.f32 %v2044, %v2063
    %2065 = vdwg.mxu0
    %2066 = vmatpush.msra.mxu0 %v1945
    %2067 = vmatpush.msra.mxu0 %v1944
    %2068 = vmatpush.msra.mxu0 %v1943
    %2069 = vmatpush.msra.mxu0 %v1942
    %2070 = vmatpush.msra.mxu0 %v1941
    %2071 = vmatpush.msra.mxu0 %v1940
    %2072 = vmatpush.msra.mxu0 %v1939
    %2073 = vmatpush.msra.mxu0 %v1938
    %2074 = vmatpush.msra.mxu0 %v1937
    %2075 = vmatpush.msra.mxu0 %v1936
    %2076 = vmatpush.msra.mxu0 %v1935
    %2077 = vmatpush.msra.mxu0 %v1934
    %2078 = vmatpush.msra.mxu0 %v1933
    %2079 = vmatpush.msra.mxu0 %v1932
    %2080 = vmatpush.msra.mxu0 %v1931
    %2081 = vmatpush.msra.mxu0 %v1930
    %2082 = vmatmul.f32.gmra.mxu0 %v1907
    %v2083 = vpop.f32.mrf.mxu0
    %v2084 = vadd.f32 %v2064, %v2083
    %2085 = vdwg.mxu0
    %2086 = vmatpush.msra.mxu0 %v1961
    %2087 = vmatpush.msra.mxu0 %v1960
    %2088 = vmatpush.msra.mxu0 %v1959
    %2089 = vmatpush.msra.mxu0 %v1958
    %2090 = vmatpush.msra.mxu0 %v1957
    %2091 = vmatpush.msra.mxu0 %v1956
    %2092 = vmatpush.msra.mxu0 %v1955
    %2093 = vmatpush.msra.mxu0 %v1954
    %2094 = vmatpush.msra.mxu0 %v1953
    %2095 = vmatpush.msra.mxu0 %v1952
    %2096 = vmatpush.msra.mxu0 %v1951
    %2097 = vmatpush.msra.mxu0 %v1950
    %2098 = vmatpush.msra.mxu0 %v1949
    %2099 = vmatpush.msra.mxu0 %v1948
    %2100 = vmatpush.msra.mxu0 %v1947
    %2101 = vmatpush.msra.mxu0 %v1946
    %2102 = vmatmul.f32.gmra.mxu0 %v1908
    %v2103 = vpop.f32.mrf.mxu0
    %v2104 = vadd.f32 %v2084, %v2103
    %2105 = vdwg.mxu0
    %2106 = vmatpush.msra.mxu0 %v1977
    %2107 = vmatpush.msra.mxu0 %v1976
    %2108 = vmatpush.msra.mxu0 %v1975
    %2109 = vmatpush.msra.mxu0 %v1974
    %2110 = vmatpush.msra.mxu0 %v1973
    %2111 = vmatpush.msra.mxu0 %v1972
    %2112 = vmatpush.msra.mxu0 %v1971
    %2113 = vmatpush.msra.mxu0 %v1970
    %2114 = vmatpush.msra.mxu0 %v1969
    %2115 = vmatpush.msra.mxu0 %v1968
    %2116 = vmatpush.msra.mxu0 %v1967
    %2117 = vmatpush.msra.mxu0 %v1966
    %2118 = vmatpush.msra.mxu0 %v1965
    %2119 = vmatpush.msra.mxu0 %v1964
    %2120 = vmatpush.msra.mxu0 %v1963
    %2121 = vmatpush.msra.mxu0 %v1962
    %2122 = vmatmul.f32.gmra.mxu0 %v1909
    %v2123 = vpop.f32.mrf.mxu0
    %v2124 = vadd.f32 %v2104, %v2123
    %2125 = vdwg.mxu0
    %2126 = vmatpush.msra.mxu0 %v1993
    %2127 = vmatpush.msra.mxu0 %v1992
    %2128 = vmatpush.msra.mxu0 %v1991
    %2129 = vmatpush.msra.mxu0 %v1990
    %2130 = vmatpush.msra.mxu0 %v1989
    %2131 = vmatpush.msra.mxu0 %v1988
    %2132 = vmatpush.msra.mxu0 %v1987
    %2133 = vmatpush.msra.mxu0 %v1986
    %2134 = vmatpush.msra.mxu0 %v1985
    %2135 = vmatpush.msra.mxu0 %v1984
    %2136 = vmatpush.msra.mxu0 %v1983
    %2137 = vmatpush.msra.mxu0 %v1982
    %2138 = vmatpush.msra.mxu0 %v1981
    %2139 = vmatpush.msra.mxu0 %v1980
    %2140 = vmatpush.msra.mxu0 %v1979
    %2141 = vmatpush.msra.mxu0 %v1978
    %2142 = vmatmul.f32.gmra.mxu0 %v1910
    %v2143 = vpop.f32.mrf.mxu0
    %v2144 = vadd.f32 %v2124, %v2143
    %2145 = vdwg.mxu0
    %2146 = vmatpush.msra.mxu0 %v2009
    %2147 = vmatpush.msra.mxu0 %v2008
    %2148 = vmatpush.msra.mxu0 %v2007
    %2149 = vmatpush.msra.mxu0 %v2006
    %2150 = vmatpush.msra.mxu0 %v2005
    %2151 = vmatpush.msra.mxu0 %v2004
    %2152 = vmatpush.msra.mxu0 %v2003
    %2153 = vmatpush.msra.mxu0 %v2002
    %2154 = vmatpush.msra.mxu0 %v2001
    %2155 = vmatpush.msra.mxu0 %v2000
    %2156 = vmatpush.msra.mxu0 %v1999
    %2157 = vmatpush.msra.mxu0 %v1998
    %2158 = vmatpush.msra.mxu0 %v1997
    %2159 = vmatpush.msra.mxu0 %v1996
    %2160 = vmatpush.msra.mxu0 %v1995
    %2161 = vmatpush.msra.mxu0 %v1994
    %2162 = vmatmul.f32.gmra.mxu0 %v1911
    %v2163 = vpop.f32.mrf.mxu0
    %v2164 = vadd.f32 %v2144, %v2163
    %2165 = vdwg.mxu0
    %2166 = vmatpush.msra.mxu0 %v2025
    %2167 = vmatpush.msra.mxu0 %v2024
    %2168 = vmatpush.msra.mxu0 %v2023
    %2169 = vmatpush.msra.mxu0 %v2022
    %2170 = vmatpush.msra.mxu0 %v2021
    %2171 = vmatpush.msra.mxu0 %v2020
    %2172 = vmatpush.msra.mxu0 %v2019
    %2173 = vmatpush.msra.mxu0 %v2018
    %2174 = vmatpush.msra.mxu0 %v2017
    %2175 = vmatpush.msra.mxu0 %v2016
    %2176 = vmatpush.msra.mxu0 %v2015
    %2177 = vmatpush.msra.mxu0 %v2014
    %2178 = vmatpush.msra.mxu0 %v2013
    %2179 = vmatpush.msra.mxu0 %v2012
    %2180 = vmatpush.msra.mxu0 %v2011
    %2181 = vmatpush.msra.mxu0 %v2010
    %2182 = vmatmul.f32.gmra.mxu0 %v1912
    %v2183 = vpop.f32.mrf.mxu0
    %v2184 = vadd.f32 %v2164, %v2183
    %2185 = vdwg.mxu0
    %2186 = vmatpush.msra.mxu0 %v2041
    %2187 = vmatpush.msra.mxu0 %v2040
    %2188 = vmatpush.msra.mxu0 %v2039
    %2189 = vmatpush.msra.mxu0 %v2038
    %2190 = vmatpush.msra.mxu0 %v2037
    %2191 = vmatpush.msra.mxu0 %v2036
    %2192 = vmatpush.msra.mxu0 %v2035
    %2193 = vmatpush.msra.mxu0 %v2034
    %2194 = vmatpush.msra.mxu0 %v2033
    %2195 = vmatpush.msra.mxu0 %v2032
    %2196 = vmatpush.msra.mxu0 %v2031
    %2197 = vmatpush.msra.mxu0 %v2030
    %2198 = vmatpush.msra.mxu0 %v2029
    %2199 = vmatpush.msra.mxu0 %v2028
    %2200 = vmatpush.msra.mxu0 %v2027
    %2201 = vmatpush.msra.mxu0 %v2026
    %2202 = vmatmul.f32.gmra.mxu0 %v1913
    %v2203 = vpop.f32.mrf.mxu0
    %v2204 = vadd.f32 %v2184, %v2203
    %2205 = vdwg.mxu0
    %2206 = vst [vmem:[#allocation26] sm:$0x3] %v2204
    // Predicated region
    $region126: #{tpu_custom_call.1} parent=1 // pred_check
      _
    $region127: #{tpu_custom_call.1} parent=1 // pred_check_branch
      %2208 = sbr.rel (0) target = $region129
    $region128: #{tpu_custom_call.1} parent=1 // pred_region
      %2210 = vsyncadd [#allocation4], 0
      %s2212 = sshll.u32 [#allocation26], 4
      %s2213 = int_to_ptr.vmem [resolvable:$true] %s2212
      %s2214 = sshll.u32 %s16, 4
      %s2215 = int_to_ptr.hbm [resolvable:$true] %s2214
      %2217 = dma.vmem_to_hbm [thread:$0]  %s2213, 32, %s2215, [#allocation4]
    $region129: #{tpu_custom_call.1} parent=1 // pred_fallthru
      _
    // Predicated region
    $region130: #{tpu_custom_call.1} parent=1 // pred_check
      _
    $region131: #{tpu_custom_call.1} parent=1 // pred_check_branch
      %2219 = sbr.rel (0) target = $region133
    $region132: #{tpu_custom_call.1} parent=1 // pred_region
      %2221 = dma.done [#allocation4], 32
    $region133: #{tpu_custom_call.1} parent=1 // pred_fallthru
      _
    %2222 = vsyncpa [#allocation3], 1
    %2223 = vsyncpa [#allocation6], 1
    %2224 = vsyncpa [#allocation9], 1
    %2225 = vsyncpa [#allocation12], 1
    %2226 = vsyncpa [#allocation15], 1
    %2227 = vsyncpa [#allocation18], 1
    %2228 = vsyncpa [#allocation21], 1
    %2229 = vsyncpa [#allocation24], 1
    %2230 = vsyncpa [#allocation4], 1

</llo_original>
